<compile_context>
chip_gen: v6e
topology: v6e:2x2x1
jax: 0.10.0
libtpu: 0.0.40
codegen_flags: <defaults>
</compile_context>

<pallas_src>
import functools

import jax
import jax.numpy as jnp
from jax.experimental import pallas as pl
from jax.experimental.pallas import tpu as pltpu


def _round_up(x, m):
    return (x + m - 1) // m * m


def _pick_tile(n_pad, cap=512):
    """Largest multiple of 128 that divides n_pad and is <= cap."""
    best = 128
    t = 128
    while t <= min(n_pad, cap):
        if n_pad % t == 0:
            best = t
        t += 128
    return best


def _rel_sage_kernel(a_ref, x_ref, invdeg_ref, wl_ref, wrs_ref, bs_ref,
                     o_ref, agg_ref, *, tm, tk, mxu_dtype):
    """Grid = (dst_tile i, relation r, src_tile k).

    a_ref      : (1, tm, tk)         int8 edge-count tile of A[r] (dst rows, src cols)
    x_ref      : (n_pad, F_in_p)     VMEM-resident X (sliced in-kernel)
    invdeg_ref : (1, tm, 1)          exact per-dst-row 1/deg for relation r (f32)
    wl_ref     : (1, F_in_p, F_out_p) W_l[r]
    wrs_ref    : (F_in_p, F_out_p)   sum_r W_r  (hoisted out of the r loop)
    bs_ref     : (1, F_out_p)        sum_r b    (hoisted out of the r loop)
    o_ref      : (tm, F_out_p)       f32 output block, resident across (r, k)
    agg_ref    : (tm, F_in_p)        f32 scratch: running unnormalized A[r] @ X
    """
    i = pl.program_id(0)
    r = pl.program_id(1)
    k = pl.program_id(2)
    nr = pl.num_programs(1)
    nk = pl.num_programs(2)

    @pl.when((r == 0) & (k == 0))
    def _():
        o_ref[...] = jnp.zeros_like(o_ref)

    @pl.when(k == 0)
    def _():
        agg_ref[...] = jnp.zeros_like(agg_ref)

    # Slice the VMEM-resident X for this src tile (no per-step HBM re-stream).
    ks = pl.multiple_of(k * tk, tk)
    xs = x_ref[pl.ds(ks, tk), :]

    # int8 edge counts -> MXU dtype.  VPU convert, cheap vs. the mem-bound A stream;
    # keeps the MXU path identical on v5e/v6e/v7x while HBM only sees 1 B/elem.
    a = a_ref[0].astype(jnp.float32).astype(mxu_dtype)

    # Unnormalized neighbor-sum tile: (tm, tk) @ (tk, F_in) -> f32 accumulator.
    agg_ref[...] += jnp.dot(a, xs, preferred_element_type=jnp.float32)

    # Exact mean (per-dst-row 1/deg, f32) + projection once per (dst tile, relation).
    # TODO(synk): when F_out < F_in, reorder to A[r] @ (X @ W_l[r]) so the O(N^2)
    # contraction and the agg scratch are F_out-wide instead of F_in-wide.
    @pl.when(k == nk - 1)
    def _():
        mean = agg_ref[...] * invdeg_ref[0]
        o_ref[...] += jnp.dot(mean.astype(mxu_dtype), wl_ref[0],
                              preferred_element_type=jnp.float32)

    # Relation-invariant root-feature term + summed bias, added exactly once.
    @pl.when((r == nr - 1) & (k == nk - 1))
    def _():
        ds_ = pl.multiple_of(i * tm, tm)
        xd = x_ref[pl.ds(ds_, tm), :]
        o_ref[...] += (jnp.dot(xd, wrs_ref[...], preferred_element_type=jnp.float32)
                       + bs_ref[...])
        # dropout=0.0 and activation=None in the reference module -> identity.
        # TODO(synk): if dropout/activation are enabled, fuse them here (note the
        # padded dst rows would then need masking before the slice).


@functools.partial(jax.jit, static_argnames=("use_bf16",))
def rel_graph_conv_layer(a_cnt, inv_deg, x, w_l, w_r, b, *, use_bf16=True):
    """a_cnt   : (R, Np, Np) int8 unnormalized edge counts, node dim pre-padded to
                 a multiple of 128 (built directly at this layout so the dominant
                 tensor is never re-materialized / re-cast host-side).
       inv_deg : (R, Np, 1) f32 exact per-dst-row 1/deg.
       x       : (N, F_in); w_l / w_r : (R, F_in, F_out); b : (R, 1, F_out).
    """
    R, n_pad, _ = a_cnt.shape
    N, F_in = x.shape
    F_out = w_l.shape[-1]
    assert n_pad % 128 == 0 and n_pad >= N

    f_in_p = _round_up(F_in, 128)
    f_out_p = _round_up(F_out, 128)
    tile = _pick_tile(n_pad, 512)
    m_tiles = n_pad // tile
    k_tiles = n_pad // tile

    compute_dtype = jnp.bfloat16 if use_bf16 else jnp.float32
    itemsize = jnp.dtype(compute_dtype).itemsize

    # Feature-dim zero padding (small tensors only; A is untouched).
    x_p = jnp.zeros((n_pad, f_in_p), compute_dtype).at[:N, :F_in].set(
        x.astype(compute_dtype))
    wl_p = jnp.zeros((R, f_in_p, f_out_p), compute_dtype).at[:, :F_in, :F_out].set(
        w_l.astype(compute_dtype))

    # Hoisted root-feature projection: sum_r W_r and sum_r b.
    wr_sum = jnp.sum(w_r, axis=0)                                   # (F_in, F_out)
    wrs_p = jnp.zeros((f_in_p, f_out_p), compute_dtype).at[:F_in, :F_out].set(
        wr_sum.astype(compute_dtype))
    b_sum = jnp.sum(b, axis=0)                                      # (1, F_out)
    bs_p = jnp.zeros((1, f_out_p), jnp.float32).at[:, :F_out].set(b_sum)

    cost = pl.CostEstimate(
        flops=(2 * R * n_pad * n_pad * f_in_p              # A @ X per relation
               + 2 * R * n_pad * f_in_p * f_out_p          # (A @ X) @ W_l per relation
               + 2 * n_pad * f_in_p * f_out_p),            # X @ sum_r W_r
        transcendentals=0,
        bytes_accessed=(R * n_pad * n_pad * 1                          # int8 A (dominant)
                        + n_pad * f_in_p * itemsize                    # resident X, once
                        + m_tiles * R * f_in_p * f_out_p * itemsize    # W_l per (i, r)
                        + R * n_pad * 4                                # inv_deg
                        + f_in_p * f_out_p * itemsize                  # sum_r W_r
                        + n_pad * f_out_p * 4),                        # output write
    )

    # Explicit VMEM budget (double-buffered inputs + resident X + f32 acc/out),
    # with headroom; floors at 32 MiB so v5e's 16 MiB default never under-provisions.
    vmem_needed = (2 * tile * tile * 1                      # A, int8, double-buffered
                   + 2 * n_pad * f_in_p * itemsize          # resident X
                   + 2 * tile * 4                           # inv_deg
                   + 2 * f_in_p * f_out_p * itemsize        # W_l
                   + 2 * f_in_p * f_out_p * itemsize        # sum_r W_r
                   + 2 * f_out_p * 4                        # sum_r b
                   + 2 * tile * f_out_p * 4                 # output block
                   + tile * f_in_p * 4)                     # agg scratch
    vmem_limit = max(min(2 * vmem_needed + (1 << 20), 96 * (1 << 20)), 32 * (1 << 20))

    kernel = functools.partial(_rel_sage_kernel, tm=tile, tk=tile,
                               mxu_dtype=compute_dtype)

    out_padded = pl.pallas_call(
        kernel,
        out_shape=jax.ShapeDtypeStruct((n_pad, f_out_p), jnp.float32),
        grid_spec=pltpu.PrefetchScalarGridSpec(
            num_scalar_prefetch=0,
            grid=(m_tiles, R, k_tiles),
            in_specs=[
                # A[r] int8 tile: the only per-step HBM stream (dominant).
                # TODO(synk): sweep pipeline_mode=pl.Buffered(3) here if profiling
                # shows exposed DMA at r/k boundaries.
                pl.BlockSpec((1, tile, tile), lambda i, r, k: (r, i, k)),
                # X: fully VMEM-resident, sliced in-kernel for src and dst rows.
                pl.BlockSpec((n_pad, f_in_p), lambda i, r, k: (0, 0)),
                # Exact per-dst-row 1/deg for relation r.
                pl.BlockSpec((1, tile, 1), lambda i, r, k: (r, i, 0)),
                # W_l[r].
                pl.BlockSpec((1, f_in_p, f_out_p), lambda i, r, k: (r, 0, 0)),
                # sum_r W_r (hoisted out of the relation loop).
                pl.BlockSpec((f_in_p, f_out_p), lambda i, r, k: (0, 0)),
                # sum_r b.
                pl.BlockSpec((1, f_out_p), lambda i, r, k: (0, 0)),
            ],
            out_specs=pl.BlockSpec((tile, f_out_p), lambda i, r, k: (i, 0)),
            scratch_shapes=[pltpu.VMEM((tile, f_in_p), jnp.float32)],
        ),
        compiler_params=pltpu.CompilerParams(
            # dst-tile axis is independent (megacore / v7x 2 TCs); relation and
            # src-tile axes are reductions into the resident output block.
            # TODO(synk): on v7x with m_tiles == 1, add a parallel F_out-block axis
            # so the second TensorCore gets work.
            dimension_semantics=("parallel", "arbitrary", "arbitrary"),
            vmem_limit_bytes=int(vmem_limit),
        ),
        cost_estimate=cost,
    )(a_cnt, x_p, inv_deg, wl_p, wrs_p, bs_p)

    return out_padded[:N, :F_out].astype(x.dtype)


def build_count_adjacency(edge_index, num_nodes, num_nodes_padded):
    """Unnormalized edge-count adjacency A[dst, src] as int8, built directly at
    the 128-padded node dim, plus the exact per-dst-row 1/deg (f32).

    Matches PyG scatter-mean over edges (duplicate edges counted in both the
    numerator and the denominator); zero-in-degree rows stay zero.
    """
    src, dst = edge_index
    cnt = jnp.zeros((num_nodes_padded, num_nodes_padded),
                    jnp.float32).at[dst, src].add(1.0)
    deg = cnt.sum(axis=-1, keepdims=True)
    inv_deg = jnp.where(deg > 0, 1.0 / deg, 0.0)
    # TODO(synk): widen the storage dtype if any edge multiplicity exceeds 127.
    return cnt.astype(jnp.int8), inv_deg


def reference_forward(a_norm, x, w_l, w_r, b):
    """Plain-JAX f32 reference for correctness checking."""
    out = jnp.zeros((x.shape[0], w_l.shape[-1]), jnp.float32)
    for r in range(a_norm.shape[0]):
        agg = a_norm[r] @ x
        out = out + agg @ w_l[r] + x @ w_r[r] + b[r]
    return out


if __name__ == "__main__":
    # Small synthetic heterogeneous graph: one node type, R relations.
    N = 64        # number of nodes
    F_IN = 32     # in_feat
    F_OUT = 32    # out_feat
    R = 3         # len(edge_types)
    E = 256       # edges per relation

    key = jax.random.PRNGKey(0)
    k_x, k_e, k_wl, k_wr, k_b = jax.random.split(key, 5)

    # Node features.
    x = jax.random.normal(k_x, (N, F_IN), jnp.float32)

    # Per-relation edge_index (2, E) -> int8 count adjacency at the padded node
    # dim + exact 1/deg (no later pad/cast pass over the dominant tensor).
    n_pad = _round_up(N, 128)
    edge_keys = jax.random.split(k_e, R)
    pairs = [
        build_count_adjacency(
            jax.random.randint(edge_keys[r], (2, E), 0, N), N, n_pad)
        for r in range(R)
    ]
    a_cnt = jnp.stack([p[0] for p in pairs], axis=0)     # (R, n_pad, n_pad) int8
    inv_deg = jnp.stack([p[1] for p in pairs], axis=0)   # (R, n_pad, 1) f32

    # Deterministic parameter init (SAGEConv per relation):
    #   lin_l: (F_in, F_out) weight + bias, lin_r: (F_in, F_out) weight, no bias.
    scale = 1.0 / jnp.sqrt(jnp.float32(F_IN))
    w_l = jax.random.uniform(k_wl, (R, F_IN, F_OUT), jnp.float32, -scale, scale)
    w_r = jax.random.uniform(k_wr, (R, F_IN, F_OUT), jnp.float32, -scale, scale)
    b = jax.random.uniform(k_b, (R, 1, F_OUT), jnp.float32, -scale, scale)

    # f32 reference on the normalized (mean-aggregation) operator.
    a_norm_ref = (a_cnt.astype(jnp.float32) * inv_deg)[:, :N, :N]
    ref = reference_forward(a_norm_ref, x, w_l, w_r, b)

    # Full-precision path: structural correctness (tiling, hoisting, padding,
    # int8 adjacency + epilogue 1/deg scaling).
    out_f32 = jax.block_until_ready(
        rel_graph_conv_layer(a_cnt, inv_deg, x, w_l, w_r, b, use_bf16=False)
    )
    assert out_f32.shape == (N, F_OUT)
    assert jnp.allclose(out_f32, ref, atol=1e-4, rtol=1e-4), "f32 mismatch vs reference"

    # Default bf16-MXU / f32-accumulate path (A and 1/deg stay exact; only X/W
    # are bf16 -> looser tolerance).
    out_bf16 = jax.block_until_ready(
        rel_graph_conv_layer(a_cnt, inv_deg, x, w_l, w_r, b, use_bf16=True)
    )
    assert out_bf16.shape == (N, F_OUT)
    assert jnp.allclose(out_bf16, ref, atol=3e-2, rtol=3e-2), "bf16 mismatch vs reference"

    # TODO(synk): for sparse graphs at scale, scalar-prefetch a per-(dst-tile,
    # relation) list of nonzero src tiles and compact the k axis so all-zero A
    # blocks are skipped entirely (largest remaining HBM win).
    print("KERNEL_OK")
</pallas_src>

<mosaic_0001>
module attributes {stable_mosaic.version = 11 : i64} {
  func.func @_rel_sage_kernel(%arg0: i32, %arg1: i32, %arg2: i32, %arg3: memref<1x128x128xi8, #tpu.memory_space<vmem>>, %arg4: memref<128x128xf32, #tpu.memory_space<vmem>>, %arg5: memref<1x128x1xf32, #tpu.memory_space<vmem>>, %arg6: memref<1x128x128xf32, #tpu.memory_space<vmem>>, %arg7: memref<128x128xf32, #tpu.memory_space<vmem>>, %arg8: memref<1x128xf32, #tpu.memory_space<vmem>>, %arg9: memref<128x128xf32, #tpu.memory_space<vmem>>, %arg10: memref<128x128xf32, #tpu.memory_space<vmem>>) attributes {dimension_semantics = [#tpu.dimension_semantics<parallel>, #tpu.dimension_semantics<arbitrary>, #tpu.dimension_semantics<arbitrary>], iteration_bounds = array<i64: 1, 3, 1>, scalar_prefetch = 0 : i64, scratch_operands = 1 : i64, tpu.core_type = #tpu.core_type<tc>, window_params = [{transform_indices = @transform_0, window_bounds = array<i64: 1, 128, 128>}, {pipeline_mode = #tpu.pipeline_mode<synchronous>, transform_indices = @transform_1, window_bounds = array<i64: 128, 128>}, {transform_indices = @transform_2, window_bounds = array<i64: 1, 128, 1>}, {transform_indices = @transform_3, window_bounds = array<i64: 1, 128, 128>}, {pipeline_mode = #tpu.pipeline_mode<synchronous>, transform_indices = @transform_4, window_bounds = array<i64: 128, 128>}, {pipeline_mode = #tpu.pipeline_mode<synchronous>, transform_indices = @transform_5, window_bounds = array<i64: 1, 128>}, {transform_indices = @transform_6, window_bounds = array<i64: 128, 128>}]} {
    %c0_i32 = arith.constant 0 : i32
    %0 = arith.cmpi eq, %arg1, %c0_i32 : i32
    %c0_i32_0 = arith.constant 0 : i32
    %1 = arith.cmpi eq, %arg2, %c0_i32_0 : i32
    %2 = arith.andi %0, %1 : i1
    %3 = arith.extui %2 : i1 to i32
    %c0_i32_1 = arith.constant 0 : i32
    %4 = arith.cmpi ne, %3, %c0_i32_1 : i32
    scf.if %4 {
      %cst_15 = arith.constant 0.000000e+00 : f32
      %27 = vector.broadcast %cst_15 : f32 to vector<128x128xf32>
      %c0_16 = arith.constant 0 : index
      %c0_17 = arith.constant 0 : index
      %28 = vector.load %arg9[%c0_16, %c0_17] : memref<128x128xf32, #tpu.memory_space<vmem>>, vector<128x128xf32>
      tpu.vector_store %arg9[%c0_16, %c0_17], %27 {strides = array<i32>} : memref<128x128xf32, #tpu.memory_space<vmem>>, vector<128x128xf32>,
    } else {
    }
    %c0_i32_2 = arith.constant 0 : i32
    %5 = arith.cmpi eq, %arg2, %c0_i32_2 : i32
    %6 = arith.extui %5 : i1 to i32
    %c0_i32_3 = arith.constant 0 : i32
    %7 = arith.cmpi ne, %6, %c0_i32_3 : i32
    scf.if %7 {
      %cst_15 = arith.constant 0.000000e+00 : f32
      %27 = vector.broadcast %cst_15 : f32 to vector<128x128xf32>
      %c0_16 = arith.constant 0 : index
      %c0_17 = arith.constant 0 : index
      %28 = vector.load %arg10[%c0_16, %c0_17] : memref<128x128xf32, #tpu.memory_space<vmem>>, vector<128x128xf32>
      tpu.vector_store %arg10[%c0_16, %c0_17], %27 {strides = array<i32>} : memref<128x128xf32, #tpu.memory_space<vmem>>, vector<128x128xf32>,
    } else {
    }
    %c128_i32 = arith.constant 128 : i32
    %8 = arith.muli %arg2, %c128_i32 : i32
    %9 = tpu.assume_multiple %8, 128 : i32
    %10 = arith.index_cast %9 : i32 to index
    %c0 = arith.constant 0 : index
    %11 = vector.load %arg4[%10, %c0] : memref<128x128xf32, #tpu.memory_space<vmem>>, vector<128x128xf32>
    %c0_4 = arith.constant 0 : index
    %c0_5 = arith.constant 0 : index
    %c0_6 = arith.constant 0 : index
    %12 = vector.load %arg3[%c0_4, %c0_5, %c0_6] : memref<1x128x128xi8, #tpu.memory_space<vmem>>, vector<1x128x128xi8>
    %13 = vector.shape_cast %12 : vector<1x128x128xi8> to vector<128x128xi8>
    %14 = arith.sitofp %13 : vector<128x128xi8> to vector<128x128xf32>
    %c0_7 = arith.constant 0 : index
    %c0_8 = arith.constant 0 : index
    %15 = vector.load %arg10[%c0_7, %c0_8] : memref<128x128xf32, #tpu.memory_space<vmem>>, vector<128x128xf32>
    %cst = arith.constant dense<0.000000e+00> : vector<128x128xf32>
    %16 = tpu.matmul %14, %11, %cst {dimension_numbers = #tpu.dot_dimension_numbers<[1], [0], [0], [1], [0, 0, 1, 1], [], []>} : vector<128x128xf32>, vector<128x128xf32>, vector<128x128xf32> -> vector<128x128xf32>
    %17 = arith.addf %15, %16 : vector<128x128xf32>
    %c0_9 = arith.constant 0 : index
    %c0_10 = arith.constant 0 : index
    %18 = vector.load %arg10[%c0_9, %c0_10] : memref<128x128xf32, #tpu.memory_space<vmem>>, vector<128x128xf32>
    tpu.vector_store %arg10[%c0_9, %c0_10], %17 {strides = array<i32>} : memref<128x128xf32, #tpu.memory_space<vmem>>, vector<128x128xf32>,
    %c0_i32_11 = arith.constant 0 : i32
    %19 = arith.cmpi eq, %arg2, %c0_i32_11 : i32
    %20 = arith.extui %19 : i1 to i32
    %c0_i32_12 = arith.constant 0 : i32
    %21 = arith.cmpi ne, %20, %c0_i32_12 : i32
    scf.if %21 {
      %c0_15 = arith.constant 0 : index
      %c0_16 = arith.constant 0 : index
      %27 = vector.load %arg10[%c0_15, %c0_16] : memref<128x128xf32, #tpu.memory_space<vmem>>, vector<128x128xf32>
      %c0_17 = arith.constant 0 : index
      %c0_18 = arith.constant 0 : index
      %c0_19 = arith.constant 0 : index
      %28 = vector.load %arg5[%c0_17, %c0_18, %c0_19] : memref<1x128x1xf32, #tpu.memory_space<vmem>>, vector<1x128x1xf32>
      %29 = vector.shape_cast %28 : vector<1x128x1xf32> to vector<128x1xf32>
      %30 = vector.broadcast %29 : vector<128x1xf32> to vector<128x128xf32>
      %31 = arith.mulf %27, %30 : vector<128x128xf32>
      %c0_20 = arith.constant 0 : index
      %c0_21 = arith.constant 0 : index
      %32 = vector.load %arg9[%c0_20, %c0_21] : memref<128x128xf32, #tpu.memory_space<vmem>>, vector<128x128xf32>
      %c0_22 = arith.constant 0 : index
      %c0_23 = arith.constant 0 : index
      %c0_24 = arith.constant 0 : index
      %33 = vector.load %arg6[%c0_22, %c0_23, %c0_24] : memref<1x128x128xf32, #tpu.memory_space<vmem>>, vector<1x128x128xf32>
      %34 = vector.shape_cast %33 : vector<1x128x128xf32> to vector<128x128xf32>
      %cst_25 = arith.constant dense<0.000000e+00> : vector<128x128xf32>
      %35 = tpu.matmul %31, %34, %cst_25 {dimension_numbers = #tpu.dot_dimension_numbers<[1], [0], [0], [1], [0, 0, 1, 1], [], []>} : vector<128x128xf32>, vector<128x128xf32>, vector<128x128xf32> -> vector<128x128xf32>
      %36 = arith.addf %32, %35 : vector<128x128xf32>
      %c0_26 = arith.constant 0 : index
      %c0_27 = arith.constant 0 : index
      %37 = vector.load %arg9[%c0_26, %c0_27] : memref<128x128xf32, #tpu.memory_space<vmem>>, vector<128x128xf32>
      tpu.vector_store %arg9[%c0_26, %c0_27], %36 {strides = array<i32>} : memref<128x128xf32, #tpu.memory_space<vmem>>, vector<128x128xf32>,
    } else {
    }
    %c2_i32 = arith.constant 2 : i32
    %22 = arith.cmpi eq, %arg1, %c2_i32 : i32
    %c0_i32_13 = arith.constant 0 : i32
    %23 = arith.cmpi eq, %arg2, %c0_i32_13 : i32
    %24 = arith.andi %22, %23 : i1
    %25 = arith.extui %24 : i1 to i32
    %c0_i32_14 = arith.constant 0 : i32
    %26 = arith.cmpi ne, %25, %c0_i32_14 : i32
    scf.if %26 {
      %c128_i32_15 = arith.constant 128 : i32
      %27 = arith.muli %arg0, %c128_i32_15 : i32
      %28 = tpu.assume_multiple %27, 128 : i32
      %29 = arith.index_cast %28 : i32 to index
      %c0_16 = arith.constant 0 : index
      %30 = vector.load %arg4[%29, %c0_16] : memref<128x128xf32, #tpu.memory_space<vmem>>, vector<128x128xf32>
      %c0_17 = arith.constant 0 : index
      %c0_18 = arith.constant 0 : index
      %31 = vector.load %arg9[%c0_17, %c0_18] : memref<128x128xf32, #tpu.memory_space<vmem>>, vector<128x128xf32>
      %c0_19 = arith.constant 0 : index
      %c0_20 = arith.constant 0 : index
      %32 = vector.load %arg7[%c0_19, %c0_20] : memref<128x128xf32, #tpu.memory_space<vmem>>, vector<128x128xf32>
      %cst_21 = arith.constant dense<0.000000e+00> : vector<128x128xf32>
      %33 = tpu.matmul %30, %32, %cst_21 {dimension_numbers = #tpu.dot_dimension_numbers<[1], [0], [0], [1], [0, 0, 1, 1], [], []>} : vector<128x128xf32>, vector<128x128xf32>, vector<128x128xf32> -> vector<128x128xf32>
      %c0_22 = arith.constant 0 : index
      %c0_23 = arith.constant 0 : index
      %34 = vector.load %arg8[%c0_22, %c0_23] : memref<1x128xf32, #tpu.memory_space<vmem>>, vector<1x128xf32>
      %35 = vector.broadcast %34 : vector<1x128xf32> to vector<128x128xf32>
      %36 = arith.addf %33, %35 : vector<128x128xf32>
      %37 = arith.addf %31, %36 : vector<128x128xf32>
      %c0_24 = arith.constant 0 : index
      %c0_25 = arith.constant 0 : index
      %38 = vector.load %arg9[%c0_24, %c0_25] : memref<128x128xf32, #tpu.memory_space<vmem>>, vector<128x128xf32>
      tpu.vector_store %arg9[%c0_24, %c0_25], %37 {strides = array<i32>} : memref<128x128xf32, #tpu.memory_space<vmem>>, vector<128x128xf32>,
    } else {
    }
    return
  }
  func.func @transform_0(%arg0: i32, %arg1: i32, %arg2: i32) -> (i32, i32, i32) {
    %c0_i32 = arith.constant 0 : i32
    return %arg1, %arg0, %arg2 : i32, i32, i32
  }
  func.func @transform_1(%arg0: i32, %arg1: i32, %arg2: i32) -> (i32, i32) {
    %c0_i32 = arith.constant 0 : i32
    %c0_i32_0 = arith.constant 0 : i32
    %c0_i32_1 = arith.constant 0 : i32
    return %c0_i32, %c0_i32_0 : i32, i32
  }
  func.func @transform_2(%arg0: i32, %arg1: i32, %arg2: i32) -> (i32, i32, i32) {
    %c0_i32 = arith.constant 0 : i32
    %c0_i32_0 = arith.constant 0 : i32
    return %arg1, %arg0, %c0_i32 : i32, i32, i32
  }
  func.func @transform_3(%arg0: i32, %arg1: i32, %arg2: i32) -> (i32, i32, i32) {
    %c0_i32 = arith.constant 0 : i32
    %c0_i32_0 = arith.constant 0 : i32
    %c0_i32_1 = arith.constant 0 : i32
    return %arg1, %c0_i32, %c0_i32_0 : i32, i32, i32
  }
  func.func @transform_4(%arg0: i32, %arg1: i32, %arg2: i32) -> (i32, i32) {
    %c0_i32 = arith.constant 0 : i32
    %c0_i32_0 = arith.constant 0 : i32
    %c0_i32_1 = arith.constant 0 : i32
    return %c0_i32, %c0_i32_0 : i32, i32
  }
  func.func @transform_5(%arg0: i32, %arg1: i32, %arg2: i32) -> (i32, i32) {
    %c0_i32 = arith.constant 0 : i32
    %c0_i32_0 = arith.constant 0 : i32
    %c0_i32_1 = arith.constant 0 : i32
    return %c0_i32, %c0_i32_0 : i32, i32
  }
  func.func @transform_6(%arg0: i32, %arg1: i32, %arg2: i32) -> (i32, i32) {
    %c0_i32 = arith.constant 0 : i32
    %c0_i32_0 = arith.constant 0 : i32
    return %arg0, %c0_i32 : i32, i32
  }
}

</mosaic_0001>

<llo_original>
// kernel: rel_graph_conv_layer.1
$region0: #{rel_graph_conv_layer.1}
  #allocation0 [shape = 'u32[]', space=smem, size = 0x4, offset = 0x4, fixed_abs, tag = 'smem constant byte address 0x4 - core index']
  #allocation1 [shape = 'u32[144,128]{1,0:T(1,128)}', space=vmem, size = 0x12000, scoped, tag = 'internal scratch']
  #allocation2 [shape = 'f32[128,128]{1,0:T(8,128)}', space=vmem, size = 0x10000, scoped, tag = 'scratch operand']
  %s0 = inlined_call_operand.vmem [shape: s8[3,128,128], index: 0, kind: input, shape index: {}]
  %s1 = inlined_call_operand.vmem [shape: f32[128,128], index: 1, kind: input, shape index: {}]
  %s2 = inlined_call_operand.vmem [shape: f32[3,128,1], index: 2, kind: input, shape index: {}]
  %s3 = inlined_call_operand.vmem [shape: f32[3,128,128], index: 3, kind: input, shape index: {}]
  %s4 = inlined_call_operand.vmem [shape: f32[128,128], index: 4, kind: input, shape index: {}]
  %s5 = inlined_call_operand.vmem [shape: f32[1,128], index: 5, kind: input, shape index: {}]
  %s6 = inlined_call_operand.vmem [shape: f32[128,128], index: 6, kind: output, shape index: {}]
  %s7 = sld [smem:[#allocation0]]
  $region73: #{rel_graph_conv_layer.1} parent=0
    _
  %s9 = ssub.s32 1, %s7
  %s10 = scalar_select 0, %s9, %s7
  loop: start=0, step=1, limit=5
  $region2: #{rel_graph_conv_layer.1} parent=0 // loop_pre_header
    _
  $region3: #{rel_graph_conv_layer.1} parent=0 // loop_header
    %s12 = sphi 0, %s16
    %p13 = scmp.ge.s32.totalorder %s12, 5
    %s19 = sphi 0, %s38
    %s20 = sphi 0, %s34
    %s21 = sphi 0, %s30
    %s22 = sphi 0, %s19
    %s23 = sphi 0, %s20
    %s24 = sphi 0, %s21
    %s25 = sphi 0, %s22
    %s26 = sphi 0, %s23
    %s27 = sphi 0, %s24
    %s45 = sphi 0, %s47
    %s48 = sphi 0, %s45
    %s49 = sphi 0, %s48
    %s65 = sphi 0, %s49
    %s69 = sphi 0, %s69
    %s71 = sphi 0, %s69
    %s72 = sphi 0, %s71
    %s86 = sphi 0, %s72
    %s94 = sphi 0, %s96
    %s97 = sphi 0, %s94
    %s98 = sphi 0, %s97
    %s114 = sphi 0, %s98
    %s120 = sphi 0, %s122
    %s123 = sphi 0, %s120
    %s124 = sphi 0, %s123
    %s140 = sphi 0, %s124
    %s144 = sphi 0, %s144
    %s146 = sphi 0, %s144
    %s147 = sphi 0, %s146
    %s161 = sphi 0, %s147
    %s165 = sphi 0, %s165
    %s167 = sphi 0, %s165
    %s168 = sphi 0, %s167
    %s182 = sphi 0, %s168
    %s188 = sphi 0, %s190
    %s191 = sphi 0, %s188
    %s192 = sphi 0, %s191
    %s208 = sphi 0, %s192
  $region4: #{rel_graph_conv_layer.1} parent=0 // loop_header_branch
    %15 = sbr.rel (%p13) target = $region8
  $region5: #{rel_graph_conv_layer.1} parent=0 // loop_body
    %s17 = ssub.s32 %s12, 1
    %s18 = ssub.s32 %s12, 2
    %s28 = sadd.s32 1, %s21
    %p29 = scmp.ge.s32.totalorder %s28, 1
    %s30 = scalar_select %p29, 0, %s28
    %s31 = sadd.s32 1, %s20
    %s32 = scalar_select %p29, %s31, %s20
    %p33 = scmp.ge.s32.totalorder %s32, 3
    %s34 = scalar_select %p33, 0, %s32
    %s35 = sadd.s32 1, %s19
    %s36 = scalar_select %p33, %s35, %s19
    %p37 = scmp.ge.s32.totalorder %s36, 1
    %s38 = scalar_select %p37, 0, %s36
    %s39 = ssub.s32 %s20, %s34
    %s40 = ssub.s32 %s19, %s38
    %s41 = sor.u32 %s39, %s40
    %s42 = ssub.s32 %s21, %s30
    %s43 = sor.u32 %s41, %s42
    %p44 = scmp.eq.s32.totalorder %s43, 0
    %s46 = sadd.s32 %s45, 1
    %s47 = scalar_select %p44, %s45, %s46
    %p50 = pneg %p44
    %p51 = scmp.eq.s32.totalorder %s12, 2
    %p52 = por %p50, %p51
    %p53 = scmp.ne.s32.totalorder %s45, %s48
    %p54 = scmp.eq.s32.totalorder %s12, 0
    %p55 = por %p53, %p54
    %p56 = scmp.ne.s32.totalorder %s45, %s48
    %p57 = scmp.eq.s32.totalorder %s17, 2
    %p58 = por %p56, %p57
    %p59 = scmp.ne.s32.totalorder %s48, %s49
    %p60 = scmp.eq.s32.totalorder %s17, 0
    %p61 = por %p59, %p60
    %p62 = scmp.ne.s32.totalorder %s48, %s49
    %p63 = scmp.eq.s32.totalorder %s18, 2
    %p64 = por %p62, %p63
    %p66 = scmp.ne.s32.totalorder %s49, %s65
    %p67 = scmp.eq.s32.totalorder %s18, 0
    %p68 = por %p66, %p67
    %s70 = sadd.s32 %s69, 1
    %p73 = scmp.eq.s32.totalorder %s12, 2
    %p74 = scmp.ne.s32.totalorder %s69, %s71
    %p75 = scmp.eq.s32.totalorder %s12, 0
    %p76 = por %p74, %p75
    %p77 = scmp.ne.s32.totalorder %s69, %s71
    %p78 = scmp.eq.s32.totalorder %s17, 2
    %p79 = por %p77, %p78
    %p80 = scmp.ne.s32.totalorder %s71, %s72
    %p81 = scmp.eq.s32.totalorder %s17, 0
    %p82 = por %p80, %p81
    %p83 = scmp.ne.s32.totalorder %s71, %s72
    %p84 = scmp.eq.s32.totalorder %s18, 2
    %p85 = por %p83, %p84
    %p87 = scmp.ne.s32.totalorder %s72, %s86
    %p88 = scmp.eq.s32.totalorder %s18, 0
    %p89 = por %p87, %p88
    %s90 = ssub.s32 %s20, %s34
    %s91 = ssub.s32 %s19, %s38
    %s92 = sor.u32 %s90, %s91
    %p93 = scmp.eq.s32.totalorder %s92, 0
    %s95 = sadd.s32 %s94, 1
    %s96 = scalar_select %p93, %s94, %s95
    %p99 = pneg %p93
    %p100 = scmp.eq.s32.totalorder %s12, 2
    %p101 = por %p99, %p100
    %p102 = scmp.ne.s32.totalorder %s94, %s97
    %p103 = scmp.eq.s32.totalorder %s12, 0
    %p104 = por %p102, %p103
    %p105 = scmp.ne.s32.totalorder %s94, %s97
    %p106 = scmp.eq.s32.totalorder %s17, 2
    %p107 = por %p105, %p106
    %p108 = scmp.ne.s32.totalorder %s97, %s98
    %p109 = scmp.eq.s32.totalorder %s17, 0
    %p110 = por %p108, %p109
    %p111 = scmp.ne.s32.totalorder %s97, %s98
    %p112 = scmp.eq.s32.totalorder %s18, 2
    %p113 = por %p111, %p112
    %p115 = scmp.ne.s32.totalorder %s98, %s114
    %p116 = scmp.eq.s32.totalorder %s18, 0
    %p117 = por %p115, %p116
    %s118 = ssub.s32 %s20, %s34
    %p119 = scmp.eq.s32.totalorder %s118, 0
    %s121 = sadd.s32 %s120, 1
    %s122 = scalar_select %p119, %s120, %s121
    %p125 = pneg %p119
    %p126 = scmp.eq.s32.totalorder %s12, 2
    %p127 = por %p125, %p126
    %p128 = scmp.ne.s32.totalorder %s120, %s123
    %p129 = scmp.eq.s32.totalorder %s12, 0
    %p130 = por %p128, %p129
    %p131 = scmp.ne.s32.totalorder %s120, %s123
    %p132 = scmp.eq.s32.totalorder %s17, 2
    %p133 = por %p131, %p132
    %p134 = scmp.ne.s32.totalorder %s123, %s124
    %p135 = scmp.eq.s32.totalorder %s17, 0
    %p136 = por %p134, %p135
    %p137 = scmp.ne.s32.totalorder %s123, %s124
    %p138 = scmp.eq.s32.totalorder %s18, 2
    %p139 = por %p137, %p138
    %p141 = scmp.ne.s32.totalorder %s124, %s140
    %p142 = scmp.eq.s32.totalorder %s18, 0
    %p143 = por %p141, %p142
    %s145 = sadd.s32 %s144, 1
    %p148 = scmp.eq.s32.totalorder %s12, 2
    %p149 = scmp.ne.s32.totalorder %s144, %s146
    %p150 = scmp.eq.s32.totalorder %s12, 0
    %p151 = por %p149, %p150
    %p152 = scmp.ne.s32.totalorder %s144, %s146
    %p153 = scmp.eq.s32.totalorder %s17, 2
    %p154 = por %p152, %p153
    %p155 = scmp.ne.s32.totalorder %s146, %s147
    %p156 = scmp.eq.s32.totalorder %s17, 0
    %p157 = por %p155, %p156
    %p158 = scmp.ne.s32.totalorder %s146, %s147
    %p159 = scmp.eq.s32.totalorder %s18, 2
    %p160 = por %p158, %p159
    %p162 = scmp.ne.s32.totalorder %s147, %s161
    %p163 = scmp.eq.s32.totalorder %s18, 0
    %p164 = por %p162, %p163
    %s166 = sadd.s32 %s165, 1
    %p169 = scmp.eq.s32.totalorder %s12, 2
    %p170 = scmp.ne.s32.totalorder %s165, %s167
    %p171 = scmp.eq.s32.totalorder %s12, 0
    %p172 = por %p170, %p171
    %p173 = scmp.ne.s32.totalorder %s165, %s167
    %p174 = scmp.eq.s32.totalorder %s17, 2
    %p175 = por %p173, %p174
    %p176 = scmp.ne.s32.totalorder %s167, %s168
    %p177 = scmp.eq.s32.totalorder %s17, 0
    %p178 = por %p176, %p177
    %p179 = scmp.ne.s32.totalorder %s167, %s168
    %p180 = scmp.eq.s32.totalorder %s18, 2
    %p181 = por %p179, %p180
    %p183 = scmp.ne.s32.totalorder %s168, %s182
    %p184 = scmp.eq.s32.totalorder %s18, 0
    %p185 = por %p183, %p184
    %s186 = ssub.s32 %s19, %s38
    %p187 = scmp.eq.s32.totalorder %s186, 0
    %s189 = sadd.s32 %s188, 1
    %s190 = scalar_select %p187, %s188, %s189
    %p193 = pneg %p187
    %p194 = scmp.eq.s32.totalorder %s12, 2
    %p195 = por %p193, %p194
    %p196 = scmp.ne.s32.totalorder %s188, %s191
    %p197 = scmp.eq.s32.totalorder %s12, 0
    %p198 = por %p196, %p197
    %p199 = scmp.ne.s32.totalorder %s188, %s191
    %p200 = scmp.eq.s32.totalorder %s17, 2
    %p201 = por %p199, %p200
    %p202 = scmp.ne.s32.totalorder %s191, %s192
    %p203 = scmp.eq.s32.totalorder %s17, 0
    %p204 = por %p202, %p203
    %p205 = scmp.ne.s32.totalorder %s191, %s192
    %p206 = scmp.eq.s32.totalorder %s18, 2
    %p207 = por %p205, %p206
    %p209 = scmp.ne.s32.totalorder %s192, %s208
    %p210 = scmp.eq.s32.totalorder %s18, 0
    %p211 = por %p209, %p210
    %p212 = scmp.le.s32.totalorder 1, %s12
    %p213 = scmp.lt.s32.totalorder %s12, 4
    %p214 = pnand %p212, %p213
    %p215 = pneg %p214
    // Predicated region
    $region9: #{rel_graph_conv_layer.1} parent=5 // pred_check
      _
    $region10: #{rel_graph_conv_layer.1} parent=5 // pred_check_branch
      %217 = sbr.rel (%p214) target = $region12
    $region11: #{rel_graph_conv_layer.1} parent=5 // pred_region
      %s218 = ssub.s32 %s12, 1
      // Predicated region
      $region13: #{rel_graph_conv_layer.1} parent=11 // pred_check
        %p219 = pneg %p82
      $region14: #{rel_graph_conv_layer.1} parent=11 // pred_check_branch
        %221 = sbr.rel (%p219) target = $region16
      $region15: #{rel_graph_conv_layer.1} parent=11 // pred_region
        _
      $region16: #{rel_graph_conv_layer.1} parent=11 // pred_fallthru
        _
      // Predicated region
      $region17: #{rel_graph_conv_layer.1} parent=11 // pred_check
        %p222 = pneg %p157
      $region18: #{rel_graph_conv_layer.1} parent=11 // pred_check_branch
        %224 = sbr.rel (%p222) target = $region20
      $region19: #{rel_graph_conv_layer.1} parent=11 // pred_region
        _
      $region20: #{rel_graph_conv_layer.1} parent=11 // pred_fallthru
        _
      // Predicated region
      $region21: #{rel_graph_conv_layer.1} parent=11 // pred_check
        %p225 = pneg %p178
      $region22: #{rel_graph_conv_layer.1} parent=11 // pred_check_branch
        %227 = sbr.rel (%p225) target = $region24
      $region23: #{rel_graph_conv_layer.1} parent=11 // pred_region
        _
      $region24: #{rel_graph_conv_layer.1} parent=11 // pred_fallthru
        _
    $region12: #{rel_graph_conv_layer.1} parent=5 // pred_fallthru
      _
    %p228 = scmp.lt.s32.totalorder %s12, 3
    // Predicated region
    $region25: #{rel_graph_conv_layer.1} parent=5 // pred_check
      %p229 = pneg %p228
    $region26: #{rel_graph_conv_layer.1} parent=5 // pred_check_branch
      %231 = sbr.rel (%p229) target = $region28
    $region27: #{rel_graph_conv_layer.1} parent=5 // pred_region
      // Predicated region
      $region29: #{rel_graph_conv_layer.1} parent=27 // pred_check
        %p232 = pneg %p55
      $region30: #{rel_graph_conv_layer.1} parent=27 // pred_check_branch
        %234 = sbr.rel (%p232) target = $region32
      $region31: #{rel_graph_conv_layer.1} parent=27 // pred_region
        %s235 = smul.u32 4, %s19
        %p236 = scmp.lt.s32.totalorder %s20, 2
        %s237 = scalar_select %p236, %s20, 2
        %p238 = scmp.lt.s32.totalorder %s235, 3
        %s239 = scalar_select %p238, %s235, 3
        %p240 = scmp.lt.s32.totalorder %s21, 0
        %s241 = scalar_select %p240, %s21, 0
        %s242 = sadd.s32 %s241, %s239
        %s243 = smul.addr %s237, 4
        %s244 = sadd.s32 %s242, %s243
        %s245 = smul.addr %s244, 8
        %s246 = scalar_lea.vmem %s0, %s245
        %s247 = smul.u32 4, %s19
      $region32: #{rel_graph_conv_layer.1} parent=27 // pred_fallthru
        _
      // Predicated region
      $region33: #{rel_graph_conv_layer.1} parent=27 // pred_check
        %p248 = pneg %p104
      $region34: #{rel_graph_conv_layer.1} parent=27 // pred_check_branch
        %250 = sbr.rel (%p248) target = $region36
      $region35: #{rel_graph_conv_layer.1} parent=27 // pred_region
        %s251 = smul.u32 16, %s19
        %p252 = scmp.lt.s32.totalorder %s20, 2
        %s253 = scalar_select %p252, %s20, 2
        %p254 = scmp.lt.s32.totalorder %s251, 15
        %s255 = scalar_select %p254, %s251, 15
        %s256 = smul.addr %s253, 16
        %s257 = sadd.s32 %s255, %s256
        %s258 = smul.addr %s257, 8
        %s259 = scalar_lea.vmem %s2, %s258
        %s260 = smul.u32 16, %s19
      $region36: #{rel_graph_conv_layer.1} parent=27 // pred_fallthru
        _
      // Predicated region
      $region37: #{rel_graph_conv_layer.1} parent=27 // pred_check
        %p261 = pneg %p130
      $region38: #{rel_graph_conv_layer.1} parent=27 // pred_check_branch
        %263 = sbr.rel (%p261) target = $region40
      $region39: #{rel_graph_conv_layer.1} parent=27 // pred_region
        %p264 = scmp.lt.s32.totalorder %s20, 2
        %s265 = scalar_select %p264, %s20, 2
        %s266 = smul.addr %s265, 16
        %s267 = smul.addr %s266, 8
        %s268 = scalar_lea.vmem %s3, %s267
      $region40: #{rel_graph_conv_layer.1} parent=27 // pred_fallthru
        _
    $region28: #{rel_graph_conv_layer.1} parent=5 // pred_fallthru
      _
    %p269 = scmp.le.s32.totalorder 1, %s12
    %p270 = scmp.lt.s32.totalorder %s12, 4
    %p271 = pnand %p269, %p270
    %p272 = pneg %p271
    // Predicated region
    $region41: #{rel_graph_conv_layer.1} parent=5 // pred_check
      _
    $region42: #{rel_graph_conv_layer.1} parent=5 // pred_check_branch
      %274 = sbr.rel (%p271) target = $region44
    $region43: #{rel_graph_conv_layer.1} parent=5 // pred_region
      %s275 = ssub.s32 %s12, 1
      %s276 = smul.u32 4, %s22
      %p277 = scmp.lt.s32.totalorder %s23, 2
      %s278 = scalar_select %p277, %s23, 2
      %p279 = scmp.lt.s32.totalorder %s276, 3
      %s280 = scalar_select %p279, %s276, 3
      %p281 = scmp.lt.s32.totalorder %s24, 0
      %s282 = scalar_select %p281, %s24, 0
      %s283 = sadd.s32 %s282, %s280
      %s284 = smul.addr %s278, 4
      %s285 = sadd.s32 %s283, %s284
      %s286 = smul.addr %s285, 8
      %s287 = scalar_lea.vmem %s0, %s286
      %p288 = pneg %p61
      %p289 = pneg %p58
      %p290 = pneg %p82
      %p291 = pneg %p79
      %s292 = smul.u32 16, %s22
      %p293 = scmp.lt.s32.totalorder %s23, 2
      %s294 = scalar_select %p293, %s23, 2
      %p295 = scmp.lt.s32.totalorder %s292, 15
      %s296 = scalar_select %p295, %s292, 15
      %s297 = smul.addr %s294, 16
      %s298 = sadd.s32 %s296, %s297
      %s299 = smul.addr %s298, 8
      %s300 = scalar_lea.vmem %s2, %s299
      %p301 = pneg %p110
      %p302 = pneg %p107
      %p303 = scmp.lt.s32.totalorder %s23, 2
      %s304 = scalar_select %p303, %s23, 2
      %s305 = smul.addr %s304, 16
      %s306 = smul.addr %s305, 8
      %s307 = scalar_lea.vmem %s3, %s306
      %p308 = pneg %p136
      %p309 = pneg %p133
      %p310 = pneg %p157
      %p311 = pneg %p154
      %p312 = pneg %p178
      %p313 = pneg %p175
      %p314 = pneg %p204
      %p315 = pneg %p201
      %s316 = smul.u32 16, %s22
      %p317 = scmp.lt.s32.totalorder %s316, 15
      %s318 = scalar_select %p317, %s316, 15
      %s319 = smul.addr %s318, 8
      %s320 = scalar_lea.vmem %s6, %s319
      %s321 = smul.u32 4, %s22
      %p322 = scmp.lt.s32.totalorder %s23, 2
      %s323 = scalar_select %p322, %s23, 2
      %p324 = scmp.lt.s32.totalorder %s321, 3
      %s325 = scalar_select %p324, %s321, 3
      %p326 = scmp.lt.s32.totalorder %s24, 0
      %s327 = scalar_select %p326, %s24, 0
      %s328 = sadd.s32 %s327, %s325
      %s329 = smul.addr %s323, 4
      %s330 = sadd.s32 %s328, %s329
      %s331 = smul.addr %s330, 8
      %s332 = scalar_lea.vmem %s0, %s331
      %s333 = smul.u32 4, %s22
      %s334 = smul.u32 16, %s22
      %p335 = scmp.lt.s32.totalorder %s23, 2
      %s336 = scalar_select %p335, %s23, 2
      %p337 = scmp.lt.s32.totalorder %s334, 15
      %s338 = scalar_select %p337, %s334, 15
      %s339 = smul.addr %s336, 16
      %s340 = sadd.s32 %s338, %s339
      %s341 = smul.addr %s340, 8
      %s342 = scalar_lea.vmem %s2, %s341
      %s343 = smul.u32 16, %s22
      %p344 = scmp.lt.s32.totalorder %s23, 2
      %s345 = scalar_select %p344, %s23, 2
      %s346 = smul.addr %s345, 16
      %s347 = smul.addr %s346, 8
      %s348 = scalar_lea.vmem %s3, %s347
      %s349 = smul.u32 16, %s22
      %p350 = scmp.lt.s32.totalorder %s349, 15
      %s351 = scalar_select %p350, %s349, 15
      %s352 = smul.addr %s351, 8
      %s353 = scalar_lea.vmem %s6, %s352
      %s354 = smul.u32 16, %s22
      %p355 = scmp.eq.s32.totalorder %s23, 0
      %p356 = scmp.eq.s32.totalorder %s24, 0
      %p357 = pnand %p355, %p356
      %p358 = pneg %p357
      // Predicated region
      $region45: #{rel_graph_conv_layer.1} parent=43 // pred_check
        _
      $region46: #{rel_graph_conv_layer.1} parent=43 // pred_check_branch
        %360 = sbr.rel (%p357) target = $region48
      $region47: #{rel_graph_conv_layer.1} parent=43 // pred_region
        %361 = vst [vmem:[%s353] sm:$0xff] 0.0
        %362 = vst [vmem:[%s353 + $0x8] sm:$0xff] 0.0
        %363 = vst [vmem:[%s353 + $0x10] sm:$0xff] 0.0
        %364 = vst [vmem:[%s353 + $0x18] sm:$0xff] 0.0
        %365 = vst [vmem:[%s353 + $0x20] sm:$0xff] 0.0
        %366 = vst [vmem:[%s353 + $0x28] sm:$0xff] 0.0
        %367 = vst [vmem:[%s353 + $0x30] sm:$0xff] 0.0
        %368 = vst [vmem:[%s353 + $0x38] sm:$0xff] 0.0
        %369 = vst [vmem:[%s353 + $0x40] sm:$0xff] 0.0
        %370 = vst [vmem:[%s353 + $0x48] sm:$0xff] 0.0
        %371 = vst [vmem:[%s353 + $0x50] sm:$0xff] 0.0
        %372 = vst [vmem:[%s353 + $0x58] sm:$0xff] 0.0
        %373 = vst [vmem:[%s353 + $0x60] sm:$0xff] 0.0
        %374 = vst [vmem:[%s353 + $0x68] sm:$0xff] 0.0
        %375 = vst [vmem:[%s353 + $0x70] sm:$0xff] 0.0
        %376 = vst [vmem:[%s353 + $0x78] sm:$0xff] 0.0
      $region48: #{rel_graph_conv_layer.1} parent=43 // pred_fallthru
        _
      // Predicated region
      $region49: #{rel_graph_conv_layer.1} parent=43 // pred_check
        %p377 = pneg %p356
      $region50: #{rel_graph_conv_layer.1} parent=43 // pred_check_branch
        %379 = sbr.rel (%p377) target = $region52
      $region51: #{rel_graph_conv_layer.1} parent=43 // pred_region
        %380 = vst [vmem:[#allocation2] sm:$0xff] 0.0
        %381 = vst [vmem:[#allocation2 + $0x8] sm:$0xff] 0.0
        %382 = vst [vmem:[#allocation2 + $0x10] sm:$0xff] 0.0
        %383 = vst [vmem:[#allocation2 + $0x18] sm:$0xff] 0.0
        %384 = vst [vmem:[#allocation2 + $0x20] sm:$0xff] 0.0
        %385 = vst [vmem:[#allocation2 + $0x28] sm:$0xff] 0.0
        %386 = vst [vmem:[#allocation2 + $0x30] sm:$0xff] 0.0
        %387 = vst [vmem:[#allocation2 + $0x38] sm:$0xff] 0.0
        %388 = vst [vmem:[#allocation2 + $0x40] sm:$0xff] 0.0
        %389 = vst [vmem:[#allocation2 + $0x48] sm:$0xff] 0.0
        %390 = vst [vmem:[#allocation2 + $0x50] sm:$0xff] 0.0
        %391 = vst [vmem:[#allocation2 + $0x58] sm:$0xff] 0.0
        %392 = vst [vmem:[#allocation2 + $0x60] sm:$0xff] 0.0
        %393 = vst [vmem:[#allocation2 + $0x68] sm:$0xff] 0.0
        %394 = vst [vmem:[#allocation2 + $0x70] sm:$0xff] 0.0
        %395 = vst [vmem:[#allocation2 + $0x78] sm:$0xff] 0.0
      $region52: #{rel_graph_conv_layer.1} parent=43 // pred_fallthru
        _
      %s396 = smul.u32 %s24, 128
      %s397 = scalar_lea.vmem %s1, %s396
      %v398 = vld [vmem:[%s397] sm:$0xff]
      %v399 = vld [vmem:[%s397 + $0x8] sm:$0xff]
      %v400 = vld [vmem:[%s397 + $0x10] sm:$0xff]
      %v401 = vld [vmem:[%s397 + $0x18] sm:$0xff]
      %v402 = vld [vmem:[%s397 + $0x20] sm:$0xff]
      %v403 = vld [vmem:[%s397 + $0x28] sm:$0xff]
      %v404 = vld [vmem:[%s397 + $0x30] sm:$0xff]
      %v405 = vld [vmem:[%s397 + $0x38] sm:$0xff]
      %v406 = vld [vmem:[%s397 + $0x40] sm:$0xff]
      %v407 = vld [vmem:[%s397 + $0x48] sm:$0xff]
      %v408 = vld [vmem:[%s397 + $0x50] sm:$0xff]
      %v409 = vld [vmem:[%s397 + $0x58] sm:$0xff]
      %v410 = vld [vmem:[%s397 + $0x60] sm:$0xff]
      %v411 = vld [vmem:[%s397 + $0x68] sm:$0xff]
      %v412 = vld [vmem:[%s397 + $0x70] sm:$0xff]
      %v413 = vld [vmem:[%s397 + $0x78] sm:$0xff]
      %v414 = vld [vmem:[%s332] sm:$0xff]
      %v415 = vld [vmem:[%s332 + $0x8] sm:$0xff]
      %v416 = vld [vmem:[%s332 + $0x10] sm:$0xff]
      %v417 = vld [vmem:[%s332 + $0x18] sm:$0xff]
      %v418 = vunpack.c.0.s8 %v414
      %v419 = vunpack.c.1.s8 %v414
      %v420 = vunpack.c.2.s8 %v414
      %v421 = vunpack.c.3.s8 %v414
      %v422 = vunpack.c.0.s8 %v415
      %v423 = vunpack.c.1.s8 %v415
      %v424 = vunpack.c.2.s8 %v415
      %v425 = vunpack.c.3.s8 %v415
      %v426 = vunpack.c.0.s8 %v416
      %v427 = vunpack.c.1.s8 %v416
      %v428 = vunpack.c.2.s8 %v416
      %v429 = vunpack.c.3.s8 %v416
      %v430 = vunpack.c.0.s8 %v417
      %v431 = vunpack.c.1.s8 %v417
      %v432 = vunpack.c.2.s8 %v417
      %v433 = vunpack.c.3.s8 %v417
      %v434 = vcvt.s32.f32 %v418
      %v435 = vcvt.s32.f32 %v419
      %v436 = vcvt.s32.f32 %v420
      %v437 = vcvt.s32.f32 %v421
      %v438 = vcvt.s32.f32 %v422
      %v439 = vcvt.s32.f32 %v423
      %v440 = vcvt.s32.f32 %v424
      %v441 = vcvt.s32.f32 %v425
      %v442 = vcvt.s32.f32 %v426
      %v443 = vcvt.s32.f32 %v427
      %v444 = vcvt.s32.f32 %v428
      %v445 = vcvt.s32.f32 %v429
      %v446 = vcvt.s32.f32 %v430
      %v447 = vcvt.s32.f32 %v431
      %v448 = vcvt.s32.f32 %v432
      %v449 = vcvt.s32.f32 %v433
      %v450 = vld [vmem:[#allocation2] sm:$0xff]
      %v451 = vld [vmem:[#allocation2 + $0x8] sm:$0xff]
      %v452 = vld [vmem:[#allocation2 + $0x10] sm:$0xff]
      %v453 = vld [vmem:[#allocation2 + $0x18] sm:$0xff]
      %v454 = vld [vmem:[#allocation2 + $0x20] sm:$0xff]
      %v455 = vld [vmem:[#allocation2 + $0x28] sm:$0xff]
      %v456 = vld [vmem:[#allocation2 + $0x30] sm:$0xff]
      %v457 = vld [vmem:[#allocation2 + $0x38] sm:$0xff]
      %v458 = vld [vmem:[#allocation2 + $0x40] sm:$0xff]
      %v459 = vld [vmem:[#allocation2 + $0x48] sm:$0xff]
      %v460 = vld [vmem:[#allocation2 + $0x50] sm:$0xff]
      %v461 = vld [vmem:[#allocation2 + $0x58] sm:$0xff]
      %v462 = vld [vmem:[#allocation2 + $0x60] sm:$0xff]
      %v463 = vld [vmem:[#allocation2 + $0x68] sm:$0xff]
      %v464 = vld [vmem:[#allocation2 + $0x70] sm:$0xff]
      %v465 = vld [vmem:[#allocation2 + $0x78] sm:$0xff]
      %466 = vmatprep.subr.mxu0 0.0
      %467 = vmatpush1.msra.mxu0 %v413
      %468 = vmatprep.subr.mxu0 0.0
      %469 = vmatpush1.msra.mxu0 %v412
      %470 = vmatprep.subr.mxu0 0.0
      %471 = vmatpush1.msra.mxu0 %v411
      %472 = vmatprep.subr.mxu0 0.0
      %473 = vmatpush1.msra.mxu0 %v410
      %474 = vmatprep.subr.mxu0 0.0
      %475 = vmatpush1.msra.mxu0 %v409
      %476 = vmatprep.subr.mxu0 0.0
      %477 = vmatpush1.msra.mxu0 %v408
      %478 = vmatprep.subr.mxu0 0.0
      %479 = vmatpush1.msra.mxu0 %v407
      %480 = vmatprep.subr.mxu0 0.0
      %481 = vmatpush1.msra.mxu0 %v406
      %482 = vmatprep.subr.mxu0 0.0
      %483 = vmatpush1.msra.mxu0 %v405
      %484 = vmatprep.subr.mxu0 0.0
      %485 = vmatpush1.msra.mxu0 %v404
      %486 = vmatprep.subr.mxu0 0.0
      %487 = vmatpush1.msra.mxu0 %v403
      %488 = vmatprep.subr.mxu0 0.0
      %489 = vmatpush1.msra.mxu0 %v402
      %490 = vmatprep.subr.mxu0 0.0
      %491 = vmatpush1.msra.mxu0 %v401
      %492 = vmatprep.subr.mxu0 0.0
      %493 = vmatpush1.msra.mxu0 %v400
      %494 = vmatprep.subr.mxu0 0.0
      %495 = vmatpush1.msra.mxu0 %v399
      %496 = vmatprep.subr.mxu0 0.0
      %497 = vmatpush1.msra.mxu0 %v398
      %498 = vmatprep.subr.mxu0 0.0
      %499 = vmatpush2.msra.mxu0 0.0
      %500 = vmatprep.subr.mxu0 0.0
      %501 = vmatpush2.msra.mxu0 0.0
      %502 = vmatprep.subr.mxu0 0.0
      %503 = vmatpush2.msra.mxu0 0.0
      %504 = vmatprep.subr.mxu0 0.0
      %505 = vmatpush2.msra.mxu0 0.0
      %506 = vmatprep.subr.mxu0 0.0
      %507 = vmatpush2.msra.mxu0 0.0
      %508 = vmatprep.subr.mxu0 0.0
      %509 = vmatpush2.msra.mxu0 0.0
      %510 = vmatprep.subr.mxu0 0.0
      %511 = vmatpush2.msra.mxu0 0.0
      %512 = vmatprep.subr.mxu0 0.0
      %513 = vmatpush2.msra.mxu0 0.0
      %514 = vmatprep.subr.mxu0 0.0
      %515 = vmatpush2.msra.mxu0 0.0
      %516 = vmatprep.subr.mxu0 0.0
      %517 = vmatpush2.msra.mxu0 0.0
      %518 = vmatprep.subr.mxu0 0.0
      %519 = vmatpush2.msra.mxu0 0.0
      %520 = vmatprep.subr.mxu0 0.0
      %521 = vmatpush2.msra.mxu0 0.0
      %522 = vmatprep.subr.mxu0 0.0
      %523 = vmatpush2.msra.mxu0 0.0
      %524 = vmatprep.subr.mxu0 0.0
      %525 = vmatpush2.msra.mxu0 0.0
      %526 = vmatprep.subr.mxu0 0.0
      %527 = vmatpush2.msra.mxu0 0.0
      %528 = vmatprep.subr.mxu0 0.0
      %529 = vmatpush2.msra.mxu0 0.0
      %530 = vmatprep.mubr.f32.mxu0 0.0
      %531 = vmatmul.mubr.f32.gmra.mxu0 %v434
      %v532 = vpop.f32.mrf.mxu0
      %v533 = vadd.f32 0.0, %v532
      %v534 = vpop.f32.mrf.mxu0
      %535 = vmatprep.mubr.f32.mxu0 0.0
      %536 = vmatmul.mubr.f32.gmra.mxu0 %v435
      %v537 = vpop.f32.mrf.mxu0
      %v538 = vadd.f32 0.0, %v537
      %v539 = vpop.f32.mrf.mxu0
      %540 = vmatprep.mubr.f32.mxu0 0.0
      %541 = vmatmul.mubr.f32.gmra.mxu0 %v436
      %v542 = vpop.f32.mrf.mxu0
      %v543 = vadd.f32 0.0, %v542
      %v544 = vpop.f32.mrf.mxu0
      %545 = vmatprep.mubr.f32.mxu0 0.0
      %546 = vmatmul.mubr.f32.gmra.mxu0 %v437
      %v547 = vpop.f32.mrf.mxu0
      %v548 = vadd.f32 0.0, %v547
      %v549 = vpop.f32.mrf.mxu0
      %550 = vmatprep.mubr.f32.mxu0 0.0
      %551 = vmatmul.mubr.f32.gmra.mxu0 %v438
      %v552 = vpop.f32.mrf.mxu0
      %v553 = vadd.f32 0.0, %v552
      %v554 = vpop.f32.mrf.mxu0
      %555 = vmatprep.mubr.f32.mxu0 0.0
      %556 = vmatmul.mubr.f32.gmra.mxu0 %v439
      %v557 = vpop.f32.mrf.mxu0
      %v558 = vadd.f32 0.0, %v557
      %v559 = vpop.f32.mrf.mxu0
      %560 = vmatprep.mubr.f32.mxu0 0.0
      %561 = vmatmul.mubr.f32.gmra.mxu0 %v440
      %v562 = vpop.f32.mrf.mxu0
      %v563 = vadd.f32 0.0, %v562
      %v564 = vpop.f32.mrf.mxu0
      %565 = vmatprep.mubr.f32.mxu0 0.0
      %566 = vmatmul.mubr.f32.gmra.mxu0 %v441
      %v567 = vpop.f32.mrf.mxu0
      %v568 = vadd.f32 0.0, %v567
      %v569 = vpop.f32.mrf.mxu0
      %570 = vmatprep.mubr.f32.mxu0 0.0
      %571 = vmatmul.mubr.f32.gmra.mxu0 %v442
      %v572 = vpop.f32.mrf.mxu0
      %v573 = vadd.f32 0.0, %v572
      %v574 = vpop.f32.mrf.mxu0
      %575 = vmatprep.mubr.f32.mxu0 0.0
      %576 = vmatmul.mubr.f32.gmra.mxu0 %v443
      %v577 = vpop.f32.mrf.mxu0
      %v578 = vadd.f32 0.0, %v577
      %v579 = vpop.f32.mrf.mxu0
      %580 = vmatprep.mubr.f32.mxu0 0.0
      %581 = vmatmul.mubr.f32.gmra.mxu0 %v444
      %v582 = vpop.f32.mrf.mxu0
      %v583 = vadd.f32 0.0, %v582
      %v584 = vpop.f32.mrf.mxu0
      %585 = vmatprep.mubr.f32.mxu0 0.0
      %586 = vmatmul.mubr.f32.gmra.mxu0 %v445
      %v587 = vpop.f32.mrf.mxu0
      %v588 = vadd.f32 0.0, %v587
      %v589 = vpop.f32.mrf.mxu0
      %590 = vmatprep.mubr.f32.mxu0 0.0
      %591 = vmatmul.mubr.f32.gmra.mxu0 %v446
      %v592 = vpop.f32.mrf.mxu0
      %v593 = vadd.f32 0.0, %v592
      %v594 = vpop.f32.mrf.mxu0
      %595 = vmatprep.mubr.f32.mxu0 0.0
      %596 = vmatmul.mubr.f32.gmra.mxu0 %v447
      %v597 = vpop.f32.mrf.mxu0
      %v598 = vadd.f32 0.0, %v597
      %v599 = vpop.f32.mrf.mxu0
      %600 = vmatprep.mubr.f32.mxu0 0.0
      %601 = vmatmul.mubr.f32.gmra.mxu0 %v448
      %v602 = vpop.f32.mrf.mxu0
      %v603 = vadd.f32 0.0, %v602
      %v604 = vpop.f32.mrf.mxu0
      %605 = vmatprep.mubr.f32.mxu0 0.0
      %606 = vmatmul.mubr.f32.gmra.mxu0 %v449
      %v607 = vpop.f32.mrf.mxu0
      %v608 = vadd.f32 0.0, %v607
      %v609 = vpop.f32.mrf.mxu0
      %610 = vdwg.mxu0
      %v611 = vadd.f32 %v450, %v533
      %v612 = vadd.f32 %v451, %v538
      %v613 = vadd.f32 %v452, %v543
      %v614 = vadd.f32 %v453, %v548
      %v615 = vadd.f32 %v454, %v553
      %v616 = vadd.f32 %v455, %v558
      %v617 = vadd.f32 %v456, %v563
      %v618 = vadd.f32 %v457, %v568
      %v619 = vadd.f32 %v458, %v573
      %v620 = vadd.f32 %v459, %v578
      %v621 = vadd.f32 %v460, %v583
      %v622 = vadd.f32 %v461, %v588
      %v623 = vadd.f32 %v462, %v593
      %v624 = vadd.f32 %v463, %v598
      %v625 = vadd.f32 %v464, %v603
      %v626 = vadd.f32 %v465, %v608
      %627 = vst [vmem:[#allocation2] sm:$0xff] %v611
      %628 = vst [vmem:[#allocation2 + $0x8] sm:$0xff] %v612
      %629 = vst [vmem:[#allocation2 + $0x10] sm:$0xff] %v613
      %630 = vst [vmem:[#allocation2 + $0x18] sm:$0xff] %v614
      %631 = vst [vmem:[#allocation2 + $0x20] sm:$0xff] %v615
      %632 = vst [vmem:[#allocation2 + $0x28] sm:$0xff] %v616
      %633 = vst [vmem:[#allocation2 + $0x30] sm:$0xff] %v617
      %634 = vst [vmem:[#allocation2 + $0x38] sm:$0xff] %v618
      %635 = vst [vmem:[#allocation2 + $0x40] sm:$0xff] %v619
      %636 = vst [vmem:[#allocation2 + $0x48] sm:$0xff] %v620
      %637 = vst [vmem:[#allocation2 + $0x50] sm:$0xff] %v621
      %638 = vst [vmem:[#allocation2 + $0x58] sm:$0xff] %v622
      %639 = vst [vmem:[#allocation2 + $0x60] sm:$0xff] %v623
      %640 = vst [vmem:[#allocation2 + $0x68] sm:$0xff] %v624
      %641 = vst [vmem:[#allocation2 + $0x70] sm:$0xff] %v625
      %642 = vst [vmem:[#allocation2 + $0x78] sm:$0xff] %v626
      // Predicated region
      $region53: #{rel_graph_conv_layer.1} parent=43 // pred_check
        %p643 = pneg %p356
      $region54: #{rel_graph_conv_layer.1} parent=43 // pred_check_branch
        %645 = sbr.rel (%p643) target = $region56
      $region55: #{rel_graph_conv_layer.1} parent=43 // pred_region
        %v646 = vld [vmem:[#allocation2] sm:$0xff]
        %v647 = vld [vmem:[#allocation2 + $0x8] sm:$0xff]
        %v648 = vld [vmem:[#allocation2 + $0x10] sm:$0xff]
        %v649 = vld [vmem:[#allocation2 + $0x18] sm:$0xff]
        %v650 = vld [vmem:[#allocation2 + $0x20] sm:$0xff]
        %v651 = vld [vmem:[#allocation2 + $0x28] sm:$0xff]
        %v652 = vld [vmem:[#allocation2 + $0x30] sm:$0xff]
        %v653 = vld [vmem:[#allocation2 + $0x38] sm:$0xff]
        %v654 = vld [vmem:[#allocation2 + $0x40] sm:$0xff]
        %v655 = vld [vmem:[#allocation2 + $0x48] sm:$0xff]
        %v656 = vld [vmem:[#allocation2 + $0x50] sm:$0xff]
        %v657 = vld [vmem:[#allocation2 + $0x58] sm:$0xff]
        %v658 = vld [vmem:[#allocation2 + $0x60] sm:$0xff]
        %v659 = vld [vmem:[#allocation2 + $0x68] sm:$0xff]
        %v660 = vld [vmem:[#allocation2 + $0x70] sm:$0xff]
        %v661 = vld [vmem:[#allocation2 + $0x78] sm:$0xff]
        %v662 = vld [vmem:[%s342] sm:$0xff]
        %v663 = vld [vmem:[%s342 + $0x8] sm:$0xff]
        %v664 = vld [vmem:[%s342 + $0x10] sm:$0xff]
        %v665 = vld [vmem:[%s342 + $0x18] sm:$0xff]
        %v666 = vld [vmem:[%s342 + $0x20] sm:$0xff]
        %v667 = vld [vmem:[%s342 + $0x28] sm:$0xff]
        %v668 = vld [vmem:[%s342 + $0x30] sm:$0xff]
        %v669 = vld [vmem:[%s342 + $0x38] sm:$0xff]
        %v670 = vld [vmem:[%s342 + $0x40] sm:$0xff]
        %v671 = vld [vmem:[%s342 + $0x48] sm:$0xff]
        %v672 = vld [vmem:[%s342 + $0x50] sm:$0xff]
        %v673 = vld [vmem:[%s342 + $0x58] sm:$0xff]
        %v674 = vld [vmem:[%s342 + $0x60] sm:$0xff]
        %v675 = vld [vmem:[%s342 + $0x68] sm:$0xff]
        %v676 = vld [vmem:[%s342 + $0x70] sm:$0xff]
        %v677 = vld [vmem:[%s342 + $0x78] sm:$0xff]
        %679 = vset.pattern.permute.xlu0 0
        %680 = vperm.xlu0 %679, %v662
        %v681 = vpop.permute.xlu0 %680
        %684 = vset.pattern.permute.xlu0 0
        %685 = vperm.xlu0 %684, %v663
        %v686 = vpop.permute.xlu0 %685
        %689 = vset.pattern.permute.xlu0 0
        %690 = vperm.xlu0 %689, %v664
        %v691 = vpop.permute.xlu0 %690
        %694 = vset.pattern.permute.xlu0 0
        %695 = vperm.xlu0 %694, %v665
        %v696 = vpop.permute.xlu0 %695
        %699 = vset.pattern.permute.xlu0 0
        %700 = vperm.xlu0 %699, %v666
        %v701 = vpop.permute.xlu0 %700
        %704 = vset.pattern.permute.xlu0 0
        %705 = vperm.xlu0 %704, %v667
        %v706 = vpop.permute.xlu0 %705
        %709 = vset.pattern.permute.xlu0 0
        %710 = vperm.xlu0 %709, %v668
        %v711 = vpop.permute.xlu0 %710
        %714 = vset.pattern.permute.xlu0 0
        %715 = vperm.xlu0 %714, %v669
        %v716 = vpop.permute.xlu0 %715
        %719 = vset.pattern.permute.xlu0 0
        %720 = vperm.xlu0 %719, %v670
        %v721 = vpop.permute.xlu0 %720
        %724 = vset.pattern.permute.xlu0 0
        %725 = vperm.xlu0 %724, %v671
        %v726 = vpop.permute.xlu0 %725
        %729 = vset.pattern.permute.xlu0 0
        %730 = vperm.xlu0 %729, %v672
        %v731 = vpop.permute.xlu0 %730
        %734 = vset.pattern.permute.xlu0 0
        %735 = vperm.xlu0 %734, %v673
        %v736 = vpop.permute.xlu0 %735
        %739 = vset.pattern.permute.xlu0 0
        %740 = vperm.xlu0 %739, %v674
        %v741 = vpop.permute.xlu0 %740
        %744 = vset.pattern.permute.xlu0 0
        %745 = vperm.xlu0 %744, %v675
        %v746 = vpop.permute.xlu0 %745
        %749 = vset.pattern.permute.xlu0 0
        %750 = vperm.xlu0 %749, %v676
        %v751 = vpop.permute.xlu0 %750
        %754 = vset.pattern.permute.xlu0 0
        %755 = vperm.xlu0 %754, %v677
        %v756 = vpop.permute.xlu0 %755
        %v758 = vmul.f32 %v646, %v681
        %v759 = vmul.f32 %v647, %v686
        %v760 = vmul.f32 %v648, %v691
        %v761 = vmul.f32 %v649, %v696
        %v762 = vmul.f32 %v650, %v701
        %v763 = vmul.f32 %v651, %v706
        %v764 = vmul.f32 %v652, %v711
        %v765 = vmul.f32 %v653, %v716
        %v766 = vmul.f32 %v654, %v721
        %v767 = vmul.f32 %v655, %v726
        %v768 = vmul.f32 %v656, %v731
        %v769 = vmul.f32 %v657, %v736
        %v770 = vmul.f32 %v658, %v741
        %v771 = vmul.f32 %v659, %v746
        %v772 = vmul.f32 %v660, %v751
        %v773 = vmul.f32 %v661, %v756
        %v774 = vld [vmem:[%s353] sm:$0xff]
        %v775 = vld [vmem:[%s353 + $0x8] sm:$0xff]
        %v776 = vld [vmem:[%s353 + $0x10] sm:$0xff]
        %v777 = vld [vmem:[%s353 + $0x18] sm:$0xff]
        %v778 = vld [vmem:[%s353 + $0x20] sm:$0xff]
        %v779 = vld [vmem:[%s353 + $0x28] sm:$0xff]
        %v780 = vld [vmem:[%s353 + $0x30] sm:$0xff]
        %v781 = vld [vmem:[%s353 + $0x38] sm:$0xff]
        %v782 = vld [vmem:[%s353 + $0x40] sm:$0xff]
        %v783 = vld [vmem:[%s353 + $0x48] sm:$0xff]
        %v784 = vld [vmem:[%s353 + $0x50] sm:$0xff]
        %v785 = vld [vmem:[%s353 + $0x58] sm:$0xff]
        %v786 = vld [vmem:[%s353 + $0x60] sm:$0xff]
        %v787 = vld [vmem:[%s353 + $0x68] sm:$0xff]
        %v788 = vld [vmem:[%s353 + $0x70] sm:$0xff]
        %v789 = vld [vmem:[%s353 + $0x78] sm:$0xff]
        %v790 = vld [vmem:[%s348] sm:$0xff]
        %v791 = vld [vmem:[%s348 + $0x8] sm:$0xff]
        %v792 = vld [vmem:[%s348 + $0x10] sm:$0xff]
        %v793 = vld [vmem:[%s348 + $0x18] sm:$0xff]
        %v794 = vld [vmem:[%s348 + $0x20] sm:$0xff]
        %v795 = vld [vmem:[%s348 + $0x28] sm:$0xff]
        %v796 = vld [vmem:[%s348 + $0x30] sm:$0xff]
        %v797 = vld [vmem:[%s348 + $0x38] sm:$0xff]
        %v798 = vld [vmem:[%s348 + $0x40] sm:$0xff]
        %v799 = vld [vmem:[%s348 + $0x48] sm:$0xff]
        %v800 = vld [vmem:[%s348 + $0x50] sm:$0xff]
        %v801 = vld [vmem:[%s348 + $0x58] sm:$0xff]
        %v802 = vld [vmem:[%s348 + $0x60] sm:$0xff]
        %v803 = vld [vmem:[%s348 + $0x68] sm:$0xff]
        %v804 = vld [vmem:[%s348 + $0x70] sm:$0xff]
        %v805 = vld [vmem:[%s348 + $0x78] sm:$0xff]
        %806 = vmatprep.subr.mxu0 0.0
        %807 = vmatpush1.msra.mxu0 %v805
        %808 = vmatprep.subr.mxu0 0.0
        %809 = vmatpush1.msra.mxu0 %v804
        %810 = vmatprep.subr.mxu0 0.0
        %811 = vmatpush1.msra.mxu0 %v803
        %812 = vmatprep.subr.mxu0 0.0
        %813 = vmatpush1.msra.mxu0 %v802
        %814 = vmatprep.subr.mxu0 0.0
        %815 = vmatpush1.msra.mxu0 %v801
        %816 = vmatprep.subr.mxu0 0.0
        %817 = vmatpush1.msra.mxu0 %v800
        %818 = vmatprep.subr.mxu0 0.0
        %819 = vmatpush1.msra.mxu0 %v799
        %820 = vmatprep.subr.mxu0 0.0
        %821 = vmatpush1.msra.mxu0 %v798
        %822 = vmatprep.subr.mxu0 0.0
        %823 = vmatpush1.msra.mxu0 %v797
        %824 = vmatprep.subr.mxu0 0.0
        %825 = vmatpush1.msra.mxu0 %v796
        %826 = vmatprep.subr.mxu0 0.0
        %827 = vmatpush1.msra.mxu0 %v795
        %828 = vmatprep.subr.mxu0 0.0
        %829 = vmatpush1.msra.mxu0 %v794
        %830 = vmatprep.subr.mxu0 0.0
        %831 = vmatpush1.msra.mxu0 %v793
        %832 = vmatprep.subr.mxu0 0.0
        %833 = vmatpush1.msra.mxu0 %v792
        %834 = vmatprep.subr.mxu0 0.0
        %835 = vmatpush1.msra.mxu0 %v791
        %836 = vmatprep.subr.mxu0 0.0
        %837 = vmatpush1.msra.mxu0 %v790
        %838 = vmatprep.subr.mxu0 0.0
        %839 = vmatpush2.msra.mxu0 0.0
        %840 = vmatprep.subr.mxu0 0.0
        %841 = vmatpush2.msra.mxu0 0.0
        %842 = vmatprep.subr.mxu0 0.0
        %843 = vmatpush2.msra.mxu0 0.0
        %844 = vmatprep.subr.mxu0 0.0
        %845 = vmatpush2.msra.mxu0 0.0
        %846 = vmatprep.subr.mxu0 0.0
        %847 = vmatpush2.msra.mxu0 0.0
        %848 = vmatprep.subr.mxu0 0.0
        %849 = vmatpush2.msra.mxu0 0.0
        %850 = vmatprep.subr.mxu0 0.0
        %851 = vmatpush2.msra.mxu0 0.0
        %852 = vmatprep.subr.mxu0 0.0
        %853 = vmatpush2.msra.mxu0 0.0
        %854 = vmatprep.subr.mxu0 0.0
        %855 = vmatpush2.msra.mxu0 0.0
        %856 = vmatprep.subr.mxu0 0.0
        %857 = vmatpush2.msra.mxu0 0.0
        %858 = vmatprep.subr.mxu0 0.0
        %859 = vmatpush2.msra.mxu0 0.0
        %860 = vmatprep.subr.mxu0 0.0
        %861 = vmatpush2.msra.mxu0 0.0
        %862 = vmatprep.subr.mxu0 0.0
        %863 = vmatpush2.msra.mxu0 0.0
        %864 = vmatprep.subr.mxu0 0.0
        %865 = vmatpush2.msra.mxu0 0.0
        %866 = vmatprep.subr.mxu0 0.0
        %867 = vmatpush2.msra.mxu0 0.0
        %868 = vmatprep.subr.mxu0 0.0
        %869 = vmatpush2.msra.mxu0 0.0
        %870 = vmatprep.mubr.f32.mxu0 0.0
        %871 = vmatmul.mubr.f32.gmra.mxu0 %v758
        %v872 = vpop.f32.mrf.mxu0
        %v873 = vadd.f32 0.0, %v872
        %v874 = vpop.f32.mrf.mxu0
        %875 = vmatprep.mubr.f32.mxu0 0.0
        %876 = vmatmul.mubr.f32.gmra.mxu0 %v759
        %v877 = vpop.f32.mrf.mxu0
        %v878 = vadd.f32 0.0, %v877
        %v879 = vpop.f32.mrf.mxu0
        %880 = vmatprep.mubr.f32.mxu0 0.0
        %881 = vmatmul.mubr.f32.gmra.mxu0 %v760
        %v882 = vpop.f32.mrf.mxu0
        %v883 = vadd.f32 0.0, %v882
        %v884 = vpop.f32.mrf.mxu0
        %885 = vmatprep.mubr.f32.mxu0 0.0
        %886 = vmatmul.mubr.f32.gmra.mxu0 %v761
        %v887 = vpop.f32.mrf.mxu0
        %v888 = vadd.f32 0.0, %v887
        %v889 = vpop.f32.mrf.mxu0
        %890 = vmatprep.mubr.f32.mxu0 0.0
        %891 = vmatmul.mubr.f32.gmra.mxu0 %v762
        %v892 = vpop.f32.mrf.mxu0
        %v893 = vadd.f32 0.0, %v892
        %v894 = vpop.f32.mrf.mxu0
        %895 = vmatprep.mubr.f32.mxu0 0.0
        %896 = vmatmul.mubr.f32.gmra.mxu0 %v763
        %v897 = vpop.f32.mrf.mxu0
        %v898 = vadd.f32 0.0, %v897
        %v899 = vpop.f32.mrf.mxu0
        %900 = vmatprep.mubr.f32.mxu0 0.0
        %901 = vmatmul.mubr.f32.gmra.mxu0 %v764
        %v902 = vpop.f32.mrf.mxu0
        %v903 = vadd.f32 0.0, %v902
        %v904 = vpop.f32.mrf.mxu0
        %905 = vmatprep.mubr.f32.mxu0 0.0
        %906 = vmatmul.mubr.f32.gmra.mxu0 %v765
        %v907 = vpop.f32.mrf.mxu0
        %v908 = vadd.f32 0.0, %v907
        %v909 = vpop.f32.mrf.mxu0
        %910 = vmatprep.mubr.f32.mxu0 0.0
        %911 = vmatmul.mubr.f32.gmra.mxu0 %v766
        %v912 = vpop.f32.mrf.mxu0
        %v913 = vadd.f32 0.0, %v912
        %v914 = vpop.f32.mrf.mxu0
        %915 = vmatprep.mubr.f32.mxu0 0.0
        %916 = vmatmul.mubr.f32.gmra.mxu0 %v767
        %v917 = vpop.f32.mrf.mxu0
        %v918 = vadd.f32 0.0, %v917
        %v919 = vpop.f32.mrf.mxu0
        %920 = vmatprep.mubr.f32.mxu0 0.0
        %921 = vmatmul.mubr.f32.gmra.mxu0 %v768
        %v922 = vpop.f32.mrf.mxu0
        %v923 = vadd.f32 0.0, %v922
        %v924 = vpop.f32.mrf.mxu0
        %925 = vmatprep.mubr.f32.mxu0 0.0
        %926 = vmatmul.mubr.f32.gmra.mxu0 %v769
        %v927 = vpop.f32.mrf.mxu0
        %v928 = vadd.f32 0.0, %v927
        %v929 = vpop.f32.mrf.mxu0
        %930 = vmatprep.mubr.f32.mxu0 0.0
        %931 = vmatmul.mubr.f32.gmra.mxu0 %v770
        %v932 = vpop.f32.mrf.mxu0
        %v933 = vadd.f32 0.0, %v932
        %v934 = vpop.f32.mrf.mxu0
        %935 = vmatprep.mubr.f32.mxu0 0.0
        %936 = vmatmul.mubr.f32.gmra.mxu0 %v771
        %v937 = vpop.f32.mrf.mxu0
        %v938 = vadd.f32 0.0, %v937
        %v939 = vpop.f32.mrf.mxu0
        %940 = vmatprep.mubr.f32.mxu0 0.0
        %941 = vmatmul.mubr.f32.gmra.mxu0 %v772
        %v942 = vpop.f32.mrf.mxu0
        %v943 = vadd.f32 0.0, %v942
        %v944 = vpop.f32.mrf.mxu0
        %945 = vmatprep.mubr.f32.mxu0 0.0
        %946 = vmatmul.mubr.f32.gmra.mxu0 %v773
        %v947 = vpop.f32.mrf.mxu0
        %v948 = vadd.f32 0.0, %v947
        %v949 = vpop.f32.mrf.mxu0
        %950 = vdwg.mxu0
        %v951 = vadd.f32 %v774, %v873
        %v952 = vadd.f32 %v775, %v878
        %v953 = vadd.f32 %v776, %v883
        %v954 = vadd.f32 %v777, %v888
        %v955 = vadd.f32 %v778, %v893
        %v956 = vadd.f32 %v779, %v898
        %v957 = vadd.f32 %v780, %v903
        %v958 = vadd.f32 %v781, %v908
        %v959 = vadd.f32 %v782, %v913
        %v960 = vadd.f32 %v783, %v918
        %v961 = vadd.f32 %v784, %v923
        %v962 = vadd.f32 %v785, %v928
        %v963 = vadd.f32 %v786, %v933
        %v964 = vadd.f32 %v787, %v938
        %v965 = vadd.f32 %v788, %v943
        %v966 = vadd.f32 %v789, %v948
        %967 = vst [vmem:[%s353] sm:$0xff] %v951
        %968 = vst [vmem:[%s353 + $0x8] sm:$0xff] %v952
        %969 = vst [vmem:[%s353 + $0x10] sm:$0xff] %v953
        %970 = vst [vmem:[%s353 + $0x18] sm:$0xff] %v954
        %971 = vst [vmem:[%s353 + $0x20] sm:$0xff] %v955
        %972 = vst [vmem:[%s353 + $0x28] sm:$0xff] %v956
        %973 = vst [vmem:[%s353 + $0x30] sm:$0xff] %v957
        %974 = vst [vmem:[%s353 + $0x38] sm:$0xff] %v958
        %975 = vst [vmem:[%s353 + $0x40] sm:$0xff] %v959
        %976 = vst [vmem:[%s353 + $0x48] sm:$0xff] %v960
        %977 = vst [vmem:[%s353 + $0x50] sm:$0xff] %v961
        %978 = vst [vmem:[%s353 + $0x58] sm:$0xff] %v962
        %979 = vst [vmem:[%s353 + $0x60] sm:$0xff] %v963
        %980 = vst [vmem:[%s353 + $0x68] sm:$0xff] %v964
        %981 = vst [vmem:[%s353 + $0x70] sm:$0xff] %v965
        %982 = vst [vmem:[%s353 + $0x78] sm:$0xff] %v966
      $region56: #{rel_graph_conv_layer.1} parent=43 // pred_fallthru
        _
      %p983 = scmp.eq.s32.totalorder %s23, 2
      %p984 = pnand %p983, %p356
      %p985 = pneg %p984
      // Predicated region
      $region57: #{rel_graph_conv_layer.1} parent=43 // pred_check
        _
      $region58: #{rel_graph_conv_layer.1} parent=43 // pred_check_branch
        %987 = sbr.rel (%p984) target = $region60
      $region59: #{rel_graph_conv_layer.1} parent=43 // pred_region
        %s988 = smul.u32 %s22, 128
        %s989 = scalar_lea.vmem %s1, %s988
        %v990 = vld [vmem:[%s989] sm:$0xff]
        %v991 = vld [vmem:[%s989 + $0x8] sm:$0xff]
        %v992 = vld [vmem:[%s989 + $0x10] sm:$0xff]
        %v993 = vld [vmem:[%s989 + $0x18] sm:$0xff]
        %v994 = vld [vmem:[%s989 + $0x20] sm:$0xff]
        %v995 = vld [vmem:[%s989 + $0x28] sm:$0xff]
        %v996 = vld [vmem:[%s989 + $0x30] sm:$0xff]
        %v997 = vld [vmem:[%s989 + $0x38] sm:$0xff]
        %v998 = vld [vmem:[%s989 + $0x40] sm:$0xff]
        %v999 = vld [vmem:[%s989 + $0x48] sm:$0xff]
        %v1000 = vld [vmem:[%s989 + $0x50] sm:$0xff]
        %v1001 = vld [vmem:[%s989 + $0x58] sm:$0xff]
        %v1002 = vld [vmem:[%s989 + $0x60] sm:$0xff]
        %v1003 = vld [vmem:[%s989 + $0x68] sm:$0xff]
        %v1004 = vld [vmem:[%s989 + $0x70] sm:$0xff]
        %v1005 = vld [vmem:[%s989 + $0x78] sm:$0xff]
        %v1006 = vld [vmem:[%s353] sm:$0xff]
        %v1007 = vld [vmem:[%s353 + $0x8] sm:$0xff]
        %v1008 = vld [vmem:[%s353 + $0x10] sm:$0xff]
        %v1009 = vld [vmem:[%s353 + $0x18] sm:$0xff]
        %v1010 = vld [vmem:[%s353 + $0x20] sm:$0xff]
        %v1011 = vld [vmem:[%s353 + $0x28] sm:$0xff]
        %v1012 = vld [vmem:[%s353 + $0x30] sm:$0xff]
        %v1013 = vld [vmem:[%s353 + $0x38] sm:$0xff]
        %v1014 = vld [vmem:[%s353 + $0x40] sm:$0xff]
        %v1015 = vld [vmem:[%s353 + $0x48] sm:$0xff]
        %v1016 = vld [vmem:[%s353 + $0x50] sm:$0xff]
        %v1017 = vld [vmem:[%s353 + $0x58] sm:$0xff]
        %v1018 = vld [vmem:[%s353 + $0x60] sm:$0xff]
        %v1019 = vld [vmem:[%s353 + $0x68] sm:$0xff]
        %v1020 = vld [vmem:[%s353 + $0x70] sm:$0xff]
        %v1021 = vld [vmem:[%s353 + $0x78] sm:$0xff]
        %v1022 = vld [vmem:[%s4] sm:$0xff]
        %v1023 = vld [vmem:[%s4 + $0x8] sm:$0xff]
        %v1024 = vld [vmem:[%s4 + $0x10] sm:$0xff]
        %v1025 = vld [vmem:[%s4 + $0x18] sm:$0xff]
        %v1026 = vld [vmem:[%s4 + $0x20] sm:$0xff]
        %v1027 = vld [vmem:[%s4 + $0x28] sm:$0xff]
        %v1028 = vld [vmem:[%s4 + $0x30] sm:$0xff]
        %v1029 = vld [vmem:[%s4 + $0x38] sm:$0xff]
        %v1030 = vld [vmem:[%s4 + $0x40] sm:$0xff]
        %v1031 = vld [vmem:[%s4 + $0x48] sm:$0xff]
        %v1032 = vld [vmem:[%s4 + $0x50] sm:$0xff]
        %v1033 = vld [vmem:[%s4 + $0x58] sm:$0xff]
        %v1034 = vld [vmem:[%s4 + $0x60] sm:$0xff]
        %v1035 = vld [vmem:[%s4 + $0x68] sm:$0xff]
        %v1036 = vld [vmem:[%s4 + $0x70] sm:$0xff]
        %v1037 = vld [vmem:[%s4 + $0x78] sm:$0xff]
        %v1038 = vld [vmem:[%s5] sm:$0x1]
        %v1040 = vlaneseq
        %v1041 = vshrl.u32 %v1040, 7
        %v1042 = vsub.s32 0, %v1041
        %v1043 = vrot.slane %v1038, %v1042
        %1045 = vmatprep.subr.mxu0 0.0
        %1046 = vmatpush1.msra.mxu0 %v1037
        %1047 = vmatprep.subr.mxu0 0.0
        %1048 = vmatpush1.msra.mxu0 %v1036
        %1049 = vmatprep.subr.mxu0 0.0
        %1050 = vmatpush1.msra.mxu0 %v1035
        %1051 = vmatprep.subr.mxu0 0.0
        %1052 = vmatpush1.msra.mxu0 %v1034
        %1053 = vmatprep.subr.mxu0 0.0
        %1054 = vmatpush1.msra.mxu0 %v1033
        %1055 = vmatprep.subr.mxu0 0.0
        %1056 = vmatpush1.msra.mxu0 %v1032
        %1057 = vmatprep.subr.mxu0 0.0
        %1058 = vmatpush1.msra.mxu0 %v1031
        %1059 = vmatprep.subr.mxu0 0.0
        %1060 = vmatpush1.msra.mxu0 %v1030
        %1061 = vmatprep.subr.mxu0 0.0
        %1062 = vmatpush1.msra.mxu0 %v1029
        %1063 = vmatprep.subr.mxu0 0.0
        %1064 = vmatpush1.msra.mxu0 %v1028
        %1065 = vmatprep.subr.mxu0 0.0
        %1066 = vmatpush1.msra.mxu0 %v1027
        %1067 = vmatprep.subr.mxu0 0.0
        %1068 = vmatpush1.msra.mxu0 %v1026
        %1069 = vmatprep.subr.mxu0 0.0
        %1070 = vmatpush1.msra.mxu0 %v1025
        %1071 = vmatprep.subr.mxu0 0.0
        %1072 = vmatpush1.msra.mxu0 %v1024
        %1073 = vmatprep.subr.mxu0 0.0
        %1074 = vmatpush1.msra.mxu0 %v1023
        %1075 = vmatprep.subr.mxu0 0.0
        %1076 = vmatpush1.msra.mxu0 %v1022
        %1077 = vmatprep.subr.mxu0 0.0
        %1078 = vmatpush2.msra.mxu0 0.0
        %1079 = vmatprep.subr.mxu0 0.0
        %1080 = vmatpush2.msra.mxu0 0.0
        %1081 = vmatprep.subr.mxu0 0.0
        %1082 = vmatpush2.msra.mxu0 0.0
        %1083 = vmatprep.subr.mxu0 0.0
        %1084 = vmatpush2.msra.mxu0 0.0
        %1085 = vmatprep.subr.mxu0 0.0
        %1086 = vmatpush2.msra.mxu0 0.0
        %1087 = vmatprep.subr.mxu0 0.0
        %1088 = vmatpush2.msra.mxu0 0.0
        %1089 = vmatprep.subr.mxu0 0.0
        %1090 = vmatpush2.msra.mxu0 0.0
        %1091 = vmatprep.subr.mxu0 0.0
        %1092 = vmatpush2.msra.mxu0 0.0
        %1093 = vmatprep.subr.mxu0 0.0
        %1094 = vmatpush2.msra.mxu0 0.0
        %1095 = vmatprep.subr.mxu0 0.0
        %1096 = vmatpush2.msra.mxu0 0.0
        %1097 = vmatprep.subr.mxu0 0.0
        %1098 = vmatpush2.msra.mxu0 0.0
        %1099 = vmatprep.subr.mxu0 0.0
        %1100 = vmatpush2.msra.mxu0 0.0
        %1101 = vmatprep.subr.mxu0 0.0
        %1102 = vmatpush2.msra.mxu0 0.0
        %1103 = vmatprep.subr.mxu0 0.0
        %1104 = vmatpush2.msra.mxu0 0.0
        %1105 = vmatprep.subr.mxu0 0.0
        %1106 = vmatpush2.msra.mxu0 0.0
        %1107 = vmatprep.subr.mxu0 0.0
        %1108 = vmatpush2.msra.mxu0 0.0
        %1109 = vmatprep.mubr.f32.mxu0 0.0
        %1110 = vmatmul.mubr.f32.gmra.mxu0 %v990
        %v1111 = vpop.f32.mrf.mxu0
        %v1112 = vadd.f32 %v1043, %v1111
        %v1113 = vpop.f32.mrf.mxu0
        %1114 = vmatprep.mubr.f32.mxu0 0.0
        %1115 = vmatmul.mubr.f32.gmra.mxu0 %v991
        %v1116 = vpop.f32.mrf.mxu0
        %v1117 = vadd.f32 %v1043, %v1116
        %v1118 = vpop.f32.mrf.mxu0
        %1119 = vmatprep.mubr.f32.mxu0 0.0
        %1120 = vmatmul.mubr.f32.gmra.mxu0 %v992
        %v1121 = vpop.f32.mrf.mxu0
        %v1122 = vadd.f32 %v1043, %v1121
        %v1123 = vpop.f32.mrf.mxu0
        %1124 = vmatprep.mubr.f32.mxu0 0.0
        %1125 = vmatmul.mubr.f32.gmra.mxu0 %v993
        %v1126 = vpop.f32.mrf.mxu0
        %v1127 = vadd.f32 %v1043, %v1126
        %v1128 = vpop.f32.mrf.mxu0
        %1129 = vmatprep.mubr.f32.mxu0 0.0
        %1130 = vmatmul.mubr.f32.gmra.mxu0 %v994
        %v1131 = vpop.f32.mrf.mxu0
        %v1132 = vadd.f32 %v1043, %v1131
        %v1133 = vpop.f32.mrf.mxu0
        %1134 = vmatprep.mubr.f32.mxu0 0.0
        %1135 = vmatmul.mubr.f32.gmra.mxu0 %v995
        %v1136 = vpop.f32.mrf.mxu0
        %v1137 = vadd.f32 %v1043, %v1136
        %v1138 = vpop.f32.mrf.mxu0
        %1139 = vmatprep.mubr.f32.mxu0 0.0
        %1140 = vmatmul.mubr.f32.gmra.mxu0 %v996
        %v1141 = vpop.f32.mrf.mxu0
        %v1142 = vadd.f32 %v1043, %v1141
        %v1143 = vpop.f32.mrf.mxu0
        %1144 = vmatprep.mubr.f32.mxu0 0.0
        %1145 = vmatmul.mubr.f32.gmra.mxu0 %v997
        %v1146 = vpop.f32.mrf.mxu0
        %v1147 = vadd.f32 %v1043, %v1146
        %v1148 = vpop.f32.mrf.mxu0
        %1149 = vmatprep.mubr.f32.mxu0 0.0
        %1150 = vmatmul.mubr.f32.gmra.mxu0 %v998
        %v1151 = vpop.f32.mrf.mxu0
        %v1152 = vadd.f32 %v1043, %v1151
        %v1153 = vpop.f32.mrf.mxu0
        %1154 = vmatprep.mubr.f32.mxu0 0.0
        %1155 = vmatmul.mubr.f32.gmra.mxu0 %v999
        %v1156 = vpop.f32.mrf.mxu0
        %v1157 = vadd.f32 %v1043, %v1156
        %v1158 = vpop.f32.mrf.mxu0
        %1159 = vmatprep.mubr.f32.mxu0 0.0
        %1160 = vmatmul.mubr.f32.gmra.mxu0 %v1000
        %v1161 = vpop.f32.mrf.mxu0
        %v1162 = vadd.f32 %v1043, %v1161
        %v1163 = vpop.f32.mrf.mxu0
        %1164 = vmatprep.mubr.f32.mxu0 0.0
        %1165 = vmatmul.mubr.f32.gmra.mxu0 %v1001
        %v1166 = vpop.f32.mrf.mxu0
        %v1167 = vadd.f32 %v1043, %v1166
        %v1168 = vpop.f32.mrf.mxu0
        %1169 = vmatprep.mubr.f32.mxu0 0.0
        %1170 = vmatmul.mubr.f32.gmra.mxu0 %v1002
        %v1171 = vpop.f32.mrf.mxu0
        %v1172 = vadd.f32 %v1043, %v1171
        %v1173 = vpop.f32.mrf.mxu0
        %1174 = vmatprep.mubr.f32.mxu0 0.0
        %1175 = vmatmul.mubr.f32.gmra.mxu0 %v1003
        %v1176 = vpop.f32.mrf.mxu0
        %v1177 = vadd.f32 %v1043, %v1176
        %v1178 = vpop.f32.mrf.mxu0
        %1179 = vmatprep.mubr.f32.mxu0 0.0
        %1180 = vmatmul.mubr.f32.gmra.mxu0 %v1004
        %v1181 = vpop.f32.mrf.mxu0
        %v1182 = vadd.f32 %v1043, %v1181
        %v1183 = vpop.f32.mrf.mxu0
        %1184 = vmatprep.mubr.f32.mxu0 0.0
        %1185 = vmatmul.mubr.f32.gmra.mxu0 %v1005
        %v1186 = vpop.f32.mrf.mxu0
        %v1187 = vadd.f32 %v1043, %v1186
        %v1188 = vpop.f32.mrf.mxu0
        %1189 = vdwg.mxu0
        %v1190 = vadd.f32 %v1006, %v1112
        %v1191 = vadd.f32 %v1007, %v1117
        %v1192 = vadd.f32 %v1008, %v1122
        %v1193 = vadd.f32 %v1009, %v1127
        %v1194 = vadd.f32 %v1010, %v1132
        %v1195 = vadd.f32 %v1011, %v1137
        %v1196 = vadd.f32 %v1012, %v1142
        %v1197 = vadd.f32 %v1013, %v1147
        %v1198 = vadd.f32 %v1014, %v1152
        %v1199 = vadd.f32 %v1015, %v1157
        %v1200 = vadd.f32 %v1016, %v1162
        %v1201 = vadd.f32 %v1017, %v1167
        %v1202 = vadd.f32 %v1018, %v1172
        %v1203 = vadd.f32 %v1019, %v1177
        %v1204 = vadd.f32 %v1020, %v1182
        %v1205 = vadd.f32 %v1021, %v1187
        %1206 = vst [vmem:[%s353] sm:$0xff] %v1190
        %1207 = vst [vmem:[%s353 + $0x8] sm:$0xff] %v1191
        %1208 = vst [vmem:[%s353 + $0x10] sm:$0xff] %v1192
        %1209 = vst [vmem:[%s353 + $0x18] sm:$0xff] %v1193
        %1210 = vst [vmem:[%s353 + $0x20] sm:$0xff] %v1194
        %1211 = vst [vmem:[%s353 + $0x28] sm:$0xff] %v1195
        %1212 = vst [vmem:[%s353 + $0x30] sm:$0xff] %v1196
        %1213 = vst [vmem:[%s353 + $0x38] sm:$0xff] %v1197
        %1214 = vst [vmem:[%s353 + $0x40] sm:$0xff] %v1198
        %1215 = vst [vmem:[%s353 + $0x48] sm:$0xff] %v1199
        %1216 = vst [vmem:[%s353 + $0x50] sm:$0xff] %v1200
        %1217 = vst [vmem:[%s353 + $0x58] sm:$0xff] %v1201
        %1218 = vst [vmem:[%s353 + $0x60] sm:$0xff] %v1202
        %1219 = vst [vmem:[%s353 + $0x68] sm:$0xff] %v1203
        %1220 = vst [vmem:[%s353 + $0x70] sm:$0xff] %v1204
        %1221 = vst [vmem:[%s353 + $0x78] sm:$0xff] %v1205
      $region60: #{rel_graph_conv_layer.1} parent=43 // pred_fallthru
        _
      %s1222 = smul.u32 16, %s22
      %p1223 = scmp.lt.s32.totalorder %s1222, 15
      %s1224 = scalar_select %p1223, %s1222, 15
      %s1225 = smul.addr %s1224, 8
      %s1226 = scalar_lea.vmem %s6, %s1225
      // Predicated region
      $region61: #{rel_graph_conv_layer.1} parent=43 // pred_check
        %p1227 = pneg %p201
      $region62: #{rel_graph_conv_layer.1} parent=43 // pred_check_branch
        %1229 = sbr.rel (%p1227) target = $region64
      $region63: #{rel_graph_conv_layer.1} parent=43 // pred_region
        %s1230 = smul.u32 16, %s22
      $region64: #{rel_graph_conv_layer.1} parent=43 // pred_fallthru
        _
      // Predicated region
      $region65: #{rel_graph_conv_layer.1} parent=43 // pred_check
        %p1231 = pneg %p201
      $region66: #{rel_graph_conv_layer.1} parent=43 // pred_check_branch
        %1233 = sbr.rel (%p1231) target = $region68
      $region67: #{rel_graph_conv_layer.1} parent=43 // pred_region
        %s1234 = smul.u32 16, %s22
        %p1235 = scmp.lt.s32.totalorder %s1234, 15
        %s1236 = scalar_select %p1235, %s1234, 15
        %s1237 = smul.addr %s1236, 8
        %s1238 = scalar_lea.vmem %s6, %s1237
      $region68: #{rel_graph_conv_layer.1} parent=43 // pred_fallthru
        _
    $region44: #{rel_graph_conv_layer.1} parent=5 // pred_fallthru
      _
    %p1239 = scmp.le.s32.totalorder 2, %s12
    // Predicated region
    $region69: #{rel_graph_conv_layer.1} parent=5 // pred_check
      %p1240 = pneg %p1239
    $region70: #{rel_graph_conv_layer.1} parent=5 // pred_check_branch
      %1242 = sbr.rel (%p1240) target = $region72
    $region71: #{rel_graph_conv_layer.1} parent=5 // pred_region
      %s1243 = ssub.s32 %s12, 2
    $region72: #{rel_graph_conv_layer.1} parent=5 // pred_fallthru
      _
  $region6: #{rel_graph_conv_layer.1} parent=0 // loop_footer
    %s16 = sadd.s32 1, %s12
  $region7: #{rel_graph_conv_layer.1} parent=0 // loop_footer_branch
    %11 = sbr.rel target = $region3
  $region8: #{rel_graph_conv_layer.1} parent=0 // loop_exit
    _

</llo_original>
